<compile_context>
chip_gen: v7x
topology: tpu7x:2x2x1
jax: 0.10.0
libtpu: 0.0.40
codegen_flags: <defaults>
</compile_context>

<pallas_src>
import functools

import jax
import jax.numpy as jnp
from jax.experimental import pallas as pl
from jax.experimental.pallas import tpu as pltpu

IN_DIM = 64 * 12   # 768
H1 = 256
H2 = 128
OUT = 1


def _round_up(n, m):
    return ((n + m - 1) // m) * m


def _mlp_kernel(x_ref, w1_ref, b1_ref, w2_ref, b2_ref, w3_ref, b3_ref, o_ref):
    # x streamed as f32; cast to bf16 in-kernel (MXU-native, no extra wrapper
    # pass over HBM). All matmuls accumulate in f32.
    x = x_ref[...].astype(jnp.bfloat16)

    # fc1 + relu: (TILE_B, 768) @ (768, 256)
    h1 = jnp.dot(x, w1_ref[...], preferred_element_type=jnp.float32)
    h1 = jnp.maximum(h1 + b1_ref[...], 0.0)

    # fc2 + relu: (TILE_B, 256) @ (256, 128)
    h2 = jnp.dot(h1.astype(jnp.bfloat16), w2_ref[...],
                 preferred_element_type=jnp.float32)
    h2 = jnp.maximum(h2 + b2_ref[...], 0.0)

    # fc3 (128 -> 1) as a lane-dense row: (1, 128) . (TILE_B, 128)^T -> (1, TILE_B)
    # so the output store is a full-width row, not a width-1 column. Kept in
    # f32 (fc3 is a negligible fraction of FLOPs).
    h3 = jax.lax.dot_general(
        w3_ref[...], h2,
        dimension_numbers=(((1,), (1,)), ((), ())),
        preferred_element_type=jnp.float32,
    )
    o_ref[0] = jnp.tanh(h3 + b3_ref[...])   # o_ref block: (1, 1, TILE_B)


def _forward_blocks(x, prepared, tile_b):
    """x: (n*tile_b, IN_DIM) f32 -> (n*tile_b, 1) f32. tile_b multiple of 8."""
    w1_bf, b1, w2_bf, b2, w3_row, b3 = prepared
    n = x.shape[0] // tile_b

    const = lambda i: (0, 0)   # same block every step -> weights stay resident
    grid_spec = pltpu.PrefetchScalarGridSpec(
        num_scalar_prefetch=0,
        grid=(n,),
        in_specs=[
            pl.BlockSpec((tile_b, IN_DIM), lambda i: (i, 0)),  # x tile (streamed, f32)
            pl.BlockSpec((IN_DIM, H1), const),                 # w1 (bf16, resident)
            pl.BlockSpec((1, H1), const),                      # b1 (f32)
            pl.BlockSpec((H1, H2), const),                     # w2 (bf16, resident)
            pl.BlockSpec((1, H2), const),                      # b2 (f32)
            pl.BlockSpec((1, H2), const),                      # w3 row (f32)
            pl.BlockSpec((1, OUT), const),                     # b3 (f32)
        ],
        out_specs=pl.BlockSpec((1, 1, tile_b), lambda i: (i, 0, 0)),
    )

    out = pl.pallas_call(
        _mlp_kernel,
        out_shape=jax.ShapeDtypeStruct((n, 1, tile_b), jnp.float32),
        grid_spec=grid_spec,
        compiler_params=pltpu.CompilerParams(
            dimension_semantics=("parallel",),
            vmem_limit_bytes=48 * 1024 * 1024,   # fits v7x's 64 MiB/TC with headroom
        ),
    )(x, w1_bf, b1, w2_bf, b2, w3_row, b3)

    # out[i, 0, j] is the value for batch row i*tile_b + j.
    return out.reshape(n * tile_b, 1)


def chess_value_network(x, params, *, tile_b=2048):
    """x: (B, 768) float32 -> (B, 1) float32.

    tile_b: 2048 default (safe on v7x's 64 MiB VMEM while streaming f32 x);
    4096-8192 is fine on v5e/v6e (128 MiB VMEM).
    """
    w1, b1, w2, b2, w3, b3 = params
    B = x.shape[0]

    prepared = (
        w1.astype(jnp.bfloat16),
        b1.reshape(1, H1),
        w2.astype(jnp.bfloat16),
        b2.reshape(1, H2),
        w3.reshape(1, H2),            # fc3 stays f32
        b3.reshape(1, OUT),
    )

    # Effective tile: multiple of 8, no larger than the (8-rounded) batch.
    tb = max(8, (min(tile_b, _round_up(B, 8)) // 8) * 8)

    # Ragged batches: run the divisible main part unpadded plus a small padded
    # tail call, instead of re-materializing all of x with a full jnp.pad.
    main_b = (B // tb) * tb
    pieces = []
    if main_b:
        x_main = x if main_b == B else x[:main_b]
        pieces.append(_forward_blocks(x_main, prepared, tb))
    rem = B - main_b
    if rem:
        rem_pad = _round_up(rem, 8)
        x_tail = x[main_b:]
        if rem_pad != rem:
            x_tail = jnp.pad(x_tail, ((0, rem_pad - rem), (0, 0)))
        pieces.append(_forward_blocks(x_tail, prepared, rem_pad)[:rem])
    return pieces[0] if len(pieces) == 1 else jnp.concatenate(pieces, axis=0)


def init_params(key):
    """PyTorch nn.Linear default init: U[-1/sqrt(fan_in), +1/sqrt(fan_in)]."""
    ks = jax.random.split(key, 6)

    def lin(kw, kb, fan_in, fan_out):
        bound = 1.0 / jnp.sqrt(fan_in)
        w = jax.random.uniform(kw, (fan_in, fan_out), jnp.float32, -bound, bound)
        b = jax.random.uniform(kb, (1, fan_out), jnp.float32, -bound, bound)
        return w, b

    w1, b1 = lin(ks[0], ks[1], IN_DIM, H1)
    w2, b2 = lin(ks[2], ks[3], H1, H2)
    w3, b3 = lin(ks[4], ks[5], H2, OUT)
    return (w1, b1, w2, b2, w3, b3)


def reference(x, params):
    w1, b1, w2, b2, w3, b3 = params
    h1 = jnp.maximum(x @ w1 + b1, 0.0)
    h2 = jnp.maximum(h1 @ w2 + b2, 0.0)
    return jnp.tanh(h2 @ w3 + b3)


if __name__ == "__main__":
    key = jax.random.PRNGKey(0)
    kx, kp = jax.random.split(key)

    B = 203   # ragged batch: exercises the main call + small padded tail call
    x = jax.random.normal(kx, (B, IN_DIM), jnp.float32)
    params = init_params(kp)

    ref = reference(x, params)

    # Small-tile path (main block + padded tail block).
    fwd_small = jax.jit(functools.partial(chess_value_network, tile_b=128))
    out_small = jax.block_until_ready(fwd_small(x, params))

    # Default (large-tile) path: B < tile_b -> single small padded call.
    fwd_big = jax.jit(chess_value_network)
    out_big = jax.block_until_ready(fwd_big(x, params))

    assert out_small.shape == (B, OUT), out_small.shape
    assert out_big.shape == (B, OUT), out_big.shape
    # bf16 inputs/weights with f32 accumulation: relaxed tolerance vs f32 ref.
    err_s = float(jnp.max(jnp.abs(out_small - ref)))
    err_b = float(jnp.max(jnp.abs(out_big - ref)))
    assert jnp.allclose(out_small, ref, atol=2e-2), err_s
    assert jnp.allclose(out_big, ref, atol=2e-2), err_b
    print("KERNEL_OK")
</pallas_src>

<mosaic_0001>
module attributes {stable_mosaic.version = 11 : i64} {
  func.func @_mlp_kernel(%arg0: i32, %arg1: memref<80x768xf32, #tpu.memory_space<vmem>>, %arg2: memref<768x256xbf16, #tpu.memory_space<vmem>>, %arg3: memref<1x256xf32, #tpu.memory_space<vmem>>, %arg4: memref<256x128xbf16, #tpu.memory_space<vmem>>, %arg5: memref<1x128xf32, #tpu.memory_space<vmem>>, %arg6: memref<1x128xf32, #tpu.memory_space<vmem>>, %arg7: memref<1x1xf32, #tpu.memory_space<vmem>>, %arg8: memref<1x1x80xf32, #tpu.memory_space<vmem>>) attributes {dimension_semantics = [#tpu.dimension_semantics<parallel>], iteration_bounds = array<i64: 1>, scalar_prefetch = 0 : i64, scratch_operands = 0 : i64, tpu.core_type = #tpu.core_type<tc>, window_params = [{transform_indices = @transform_0, window_bounds = array<i64: 80, 768>}, {pipeline_mode = #tpu.pipeline_mode<synchronous>, transform_indices = @transform_1, window_bounds = array<i64: 768, 256>}, {pipeline_mode = #tpu.pipeline_mode<synchronous>, transform_indices = @transform_2, window_bounds = array<i64: 1, 256>}, {pipeline_mode = #tpu.pipeline_mode<synchronous>, transform_indices = @transform_3, window_bounds = array<i64: 256, 128>}, {pipeline_mode = #tpu.pipeline_mode<synchronous>, transform_indices = @transform_4, window_bounds = array<i64: 1, 128>}, {pipeline_mode = #tpu.pipeline_mode<synchronous>, transform_indices = @transform_5, window_bounds = array<i64: 1, 128>}, {pipeline_mode = #tpu.pipeline_mode<synchronous>, transform_indices = @transform_6, window_bounds = array<i64: 1, 1>}, {transform_indices = @transform_7, window_bounds = array<i64: 1, 1, 80>}]} {
    %c0 = arith.constant 0 : index
    %c0_0 = arith.constant 0 : index
    %0 = vector.load %arg1[%c0, %c0_0] : memref<80x768xf32, #tpu.memory_space<vmem>>, vector<80x768xf32>
    %1 = arith.truncf %0 : vector<80x768xf32> to vector<80x768xbf16>
    %c0_1 = arith.constant 0 : index
    %c0_2 = arith.constant 0 : index
    %2 = vector.load %arg2[%c0_1, %c0_2] : memref<768x256xbf16, #tpu.memory_space<vmem>>, vector<768x256xbf16>
    %cst = arith.constant dense<0.000000e+00> : vector<80x256xf32>
    %3 = tpu.matmul %1, %2, %cst {dimension_numbers = #tpu.dot_dimension_numbers<[1], [0], [0], [1], [0, 0, 1, 1], [], []>} : vector<80x768xbf16>, vector<768x256xbf16>, vector<80x256xf32> -> vector<80x256xf32>
    %c0_3 = arith.constant 0 : index
    %c0_4 = arith.constant 0 : index
    %4 = vector.load %arg3[%c0_3, %c0_4] : memref<1x256xf32, #tpu.memory_space<vmem>>, vector<1x256xf32>
    %5 = vector.broadcast %4 : vector<1x256xf32> to vector<80x256xf32>
    %6 = arith.addf %3, %5 : vector<80x256xf32>
    %cst_5 = arith.constant 0.000000e+00 : f32
    %7 = vector.broadcast %cst_5 : f32 to vector<80x256xf32>
    %8 = arith.maximumf %6, %7 : vector<80x256xf32>
    %9 = arith.truncf %8 : vector<80x256xf32> to vector<80x256xbf16>
    %c0_6 = arith.constant 0 : index
    %c0_7 = arith.constant 0 : index
    %10 = vector.load %arg4[%c0_6, %c0_7] : memref<256x128xbf16, #tpu.memory_space<vmem>>, vector<256x128xbf16>
    %cst_8 = arith.constant dense<0.000000e+00> : vector<80x128xf32>
    %11 = tpu.matmul %9, %10, %cst_8 {dimension_numbers = #tpu.dot_dimension_numbers<[1], [0], [0], [1], [0, 0, 1, 1], [], []>} : vector<80x256xbf16>, vector<256x128xbf16>, vector<80x128xf32> -> vector<80x128xf32>
    %c0_9 = arith.constant 0 : index
    %c0_10 = arith.constant 0 : index
    %12 = vector.load %arg5[%c0_9, %c0_10] : memref<1x128xf32, #tpu.memory_space<vmem>>, vector<1x128xf32>
    %13 = vector.broadcast %12 : vector<1x128xf32> to vector<80x128xf32>
    %14 = arith.addf %11, %13 : vector<80x128xf32>
    %cst_11 = arith.constant 0.000000e+00 : f32
    %15 = vector.broadcast %cst_11 : f32 to vector<80x128xf32>
    %16 = arith.maximumf %14, %15 : vector<80x128xf32>
    %c0_12 = arith.constant 0 : index
    %c0_13 = arith.constant 0 : index
    %17 = vector.load %arg6[%c0_12, %c0_13] : memref<1x128xf32, #tpu.memory_space<vmem>>, vector<1x128xf32>
    %cst_14 = arith.constant dense<0.000000e+00> : vector<1x80xf32>
    %18 = tpu.matmul %17, %16, %cst_14 {dimension_numbers = #tpu.dot_dimension_numbers<[1], [1], [0], [0], [0, 0, 1, 0], [], []>} : vector<1x128xf32>, vector<80x128xf32>, vector<1x80xf32> -> vector<1x80xf32>
    %c0_15 = arith.constant 0 : index
    %c0_16 = arith.constant 0 : index
    %19 = vector.load %arg7[%c0_15, %c0_16] : memref<1x1xf32, #tpu.memory_space<vmem>>, vector<1x1xf32>
    %20 = vector.broadcast %19 : vector<1x1xf32> to vector<1x80xf32>
    %21 = arith.addf %18, %20 : vector<1x80xf32>
    %22 = math.tanh %21 : vector<1x80xf32>
    %c0_17 = arith.constant 0 : index
    %c0_18 = arith.constant 0 : index
    %c0_19 = arith.constant 0 : index
    %23 = vector.load %arg8[%c0_17, %c0_18, %c0_19] : memref<1x1x80xf32, #tpu.memory_space<vmem>>, vector<1x1x80xf32>
    %24 = vector.shape_cast %23 : vector<1x1x80xf32> to vector<1x80xf32>
    %25 = vector.shape_cast %22 : vector<1x80xf32> to vector<1x1x80xf32>
    tpu.vector_store %arg8[%c0_17, %c0_18, %c0_19], %25 {strides = array<i32>} : memref<1x1x80xf32, #tpu.memory_space<vmem>>, vector<1x1x80xf32>,
    return
  }
  func.func @transform_0(%arg0: i32) -> (i32, i32) {
    %c0_i32 = arith.constant 0 : i32
    %c0_i32_0 = arith.constant 0 : i32
    return %arg0, %c0_i32 : i32, i32
  }
  func.func @transform_1(%arg0: i32) -> (i32, i32) {
    %c0_i32 = arith.constant 0 : i32
    %c0_i32_0 = arith.constant 0 : i32
    %c0_i32_1 = arith.constant 0 : i32
    return %c0_i32, %c0_i32_0 : i32, i32
  }
  func.func @transform_2(%arg0: i32) -> (i32, i32) {
    %c0_i32 = arith.constant 0 : i32
    %c0_i32_0 = arith.constant 0 : i32
    %c0_i32_1 = arith.constant 0 : i32
    return %c0_i32, %c0_i32_0 : i32, i32
  }
  func.func @transform_3(%arg0: i32) -> (i32, i32) {
    %c0_i32 = arith.constant 0 : i32
    %c0_i32_0 = arith.constant 0 : i32
    %c0_i32_1 = arith.constant 0 : i32
    return %c0_i32, %c0_i32_0 : i32, i32
  }
  func.func @transform_4(%arg0: i32) -> (i32, i32) {
    %c0_i32 = arith.constant 0 : i32
    %c0_i32_0 = arith.constant 0 : i32
    %c0_i32_1 = arith.constant 0 : i32
    return %c0_i32, %c0_i32_0 : i32, i32
  }
  func.func @transform_5(%arg0: i32) -> (i32, i32) {
    %c0_i32 = arith.constant 0 : i32
    %c0_i32_0 = arith.constant 0 : i32
    %c0_i32_1 = arith.constant 0 : i32
    return %c0_i32, %c0_i32_0 : i32, i32
  }
  func.func @transform_6(%arg0: i32) -> (i32, i32) {
    %c0_i32 = arith.constant 0 : i32
    %c0_i32_0 = arith.constant 0 : i32
    %c0_i32_1 = arith.constant 0 : i32
    return %c0_i32, %c0_i32_0 : i32, i32
  }
  func.func @transform_7(%arg0: i32) -> (i32, i32, i32) {
    %c0_i32 = arith.constant 0 : i32
    %c0_i32_0 = arith.constant 0 : i32
    %c0_i32_1 = arith.constant 0 : i32
    return %arg0, %c0_i32, %c0_i32_0 : i32, i32, i32
  }
}

module attributes {stable_mosaic.version = 11 : i64} {
  func.func @_mlp_kernel(%arg0: i32, %arg1: memref<128x768xf32, #tpu.memory_space<vmem>>, %arg2: memref<768x256xbf16, #tpu.memory_space<vmem>>, %arg3: memref<1x256xf32, #tpu.memory_space<vmem>>, %arg4: memref<256x128xbf16, #tpu.memory_space<vmem>>, %arg5: memref<1x128xf32, #tpu.memory_space<vmem>>, %arg6: memref<1x128xf32, #tpu.memory_space<vmem>>, %arg7: memref<1x1xf32, #tpu.memory_space<vmem>>, %arg8: memref<1x1x128xf32, #tpu.memory_space<vmem>>) attributes {dimension_semantics = [#tpu.dimension_semantics<parallel>], iteration_bounds = array<i64: 1>, scalar_prefetch = 0 : i64, scratch_operands = 0 : i64, tpu.core_type = #tpu.core_type<tc>, window_params = [{transform_indices = @transform_0, window_bounds = array<i64: 128, 768>}, {pipeline_mode = #tpu.pipeline_mode<synchronous>, transform_indices = @transform_1, window_bounds = array<i64: 768, 256>}, {pipeline_mode = #tpu.pipeline_mode<synchronous>, transform_indices = @transform_2, window_bounds = array<i64: 1, 256>}, {pipeline_mode = #tpu.pipeline_mode<synchronous>, transform_indices = @transform_3, window_bounds = array<i64: 256, 128>}, {pipeline_mode = #tpu.pipeline_mode<synchronous>, transform_indices = @transform_4, window_bounds = array<i64: 1, 128>}, {pipeline_mode = #tpu.pipeline_mode<synchronous>, transform_indices = @transform_5, window_bounds = array<i64: 1, 128>}, {pipeline_mode = #tpu.pipeline_mode<synchronous>, transform_indices = @transform_6, window_bounds = array<i64: 1, 1>}, {transform_indices = @transform_7, window_bounds = array<i64: 1, 1, 128>}]} {
    %c0 = arith.constant 0 : index
    %c0_0 = arith.constant 0 : index
    %0 = vector.load %arg1[%c0, %c0_0] : memref<128x768xf32, #tpu.memory_space<vmem>>, vector<128x768xf32>
    %1 = arith.truncf %0 : vector<128x768xf32> to vector<128x768xbf16>
    %c0_1 = arith.constant 0 : index
    %c0_2 = arith.constant 0 : index
    %2 = vector.load %arg2[%c0_1, %c0_2] : memref<768x256xbf16, #tpu.memory_space<vmem>>, vector<768x256xbf16>
    %cst = arith.constant dense<0.000000e+00> : vector<128x256xf32>
    %3 = tpu.matmul %1, %2, %cst {dimension_numbers = #tpu.dot_dimension_numbers<[1], [0], [0], [1], [0, 0, 1, 1], [], []>} : vector<128x768xbf16>, vector<768x256xbf16>, vector<128x256xf32> -> vector<128x256xf32>
    %c0_3 = arith.constant 0 : index
    %c0_4 = arith.constant 0 : index
    %4 = vector.load %arg3[%c0_3, %c0_4] : memref<1x256xf32, #tpu.memory_space<vmem>>, vector<1x256xf32>
    %5 = vector.broadcast %4 : vector<1x256xf32> to vector<128x256xf32>
    %6 = arith.addf %3, %5 : vector<128x256xf32>
    %cst_5 = arith.constant 0.000000e+00 : f32
    %7 = vector.broadcast %cst_5 : f32 to vector<128x256xf32>
    %8 = arith.maximumf %6, %7 : vector<128x256xf32>
    %9 = arith.truncf %8 : vector<128x256xf32> to vector<128x256xbf16>
    %c0_6 = arith.constant 0 : index
    %c0_7 = arith.constant 0 : index
    %10 = vector.load %arg4[%c0_6, %c0_7] : memref<256x128xbf16, #tpu.memory_space<vmem>>, vector<256x128xbf16>
    %cst_8 = arith.constant dense<0.000000e+00> : vector<128x128xf32>
    %11 = tpu.matmul %9, %10, %cst_8 {dimension_numbers = #tpu.dot_dimension_numbers<[1], [0], [0], [1], [0, 0, 1, 1], [], []>} : vector<128x256xbf16>, vector<256x128xbf16>, vector<128x128xf32> -> vector<128x128xf32>
    %c0_9 = arith.constant 0 : index
    %c0_10 = arith.constant 0 : index
    %12 = vector.load %arg5[%c0_9, %c0_10] : memref<1x128xf32, #tpu.memory_space<vmem>>, vector<1x128xf32>
    %13 = vector.broadcast %12 : vector<1x128xf32> to vector<128x128xf32>
    %14 = arith.addf %11, %13 : vector<128x128xf32>
    %cst_11 = arith.constant 0.000000e+00 : f32
    %15 = vector.broadcast %cst_11 : f32 to vector<128x128xf32>
    %16 = arith.maximumf %14, %15 : vector<128x128xf32>
    %c0_12 = arith.constant 0 : index
    %c0_13 = arith.constant 0 : index
    %17 = vector.load %arg6[%c0_12, %c0_13] : memref<1x128xf32, #tpu.memory_space<vmem>>, vector<1x128xf32>
    %cst_14 = arith.constant dense<0.000000e+00> : vector<1x128xf32>
    %18 = tpu.matmul %17, %16, %cst_14 {dimension_numbers = #tpu.dot_dimension_numbers<[1], [1], [0], [0], [0, 0, 1, 0], [], []>} : vector<1x128xf32>, vector<128x128xf32>, vector<1x128xf32> -> vector<1x128xf32>
    %c0_15 = arith.constant 0 : index
    %c0_16 = arith.constant 0 : index
    %19 = vector.load %arg7[%c0_15, %c0_16] : memref<1x1xf32, #tpu.memory_space<vmem>>, vector<1x1xf32>
    %20 = vector.broadcast %19 : vector<1x1xf32> to vector<1x128xf32>
    %21 = arith.addf %18, %20 : vector<1x128xf32>
    %22 = math.tanh %21 : vector<1x128xf32>
    %c0_17 = arith.constant 0 : index
    %c0_18 = arith.constant 0 : index
    %c0_19 = arith.constant 0 : index
    %23 = vector.load %arg8[%c0_17, %c0_18, %c0_19] : memref<1x1x128xf32, #tpu.memory_space<vmem>>, vector<1x1x128xf32>
    %24 = vector.shape_cast %23 : vector<1x1x128xf32> to vector<1x128xf32>
    %25 = vector.shape_cast %22 : vector<1x128xf32> to vector<1x1x128xf32>
    tpu.vector_store %arg8[%c0_17, %c0_18, %c0_19], %25 {strides = array<i32>} : memref<1x1x128xf32, #tpu.memory_space<vmem>>, vector<1x1x128xf32>,
    return
  }
  func.func @transform_0(%arg0: i32) -> (i32, i32) {
    %c0_i32 = arith.constant 0 : i32
    %c0_i32_0 = arith.constant 0 : i32
    return %arg0, %c0_i32 : i32, i32
  }
  func.func @transform_1(%arg0: i32) -> (i32, i32) {
    %c0_i32 = arith.constant 0 : i32
    %c0_i32_0 = arith.constant 0 : i32
    %c0_i32_1 = arith.constant 0 : i32
    return %c0_i32, %c0_i32_0 : i32, i32
  }
  func.func @transform_2(%arg0: i32) -> (i32, i32) {
    %c0_i32 = arith.constant 0 : i32
    %c0_i32_0 = arith.constant 0 : i32
    %c0_i32_1 = arith.constant 0 : i32
    return %c0_i32, %c0_i32_0 : i32, i32
  }
  func.func @transform_3(%arg0: i32) -> (i32, i32) {
    %c0_i32 = arith.constant 0 : i32
    %c0_i32_0 = arith.constant 0 : i32
    %c0_i32_1 = arith.constant 0 : i32
    return %c0_i32, %c0_i32_0 : i32, i32
  }
  func.func @transform_4(%arg0: i32) -> (i32, i32) {
    %c0_i32 = arith.constant 0 : i32
    %c0_i32_0 = arith.constant 0 : i32
    %c0_i32_1 = arith.constant 0 : i32
    return %c0_i32, %c0_i32_0 : i32, i32
  }
  func.func @transform_5(%arg0: i32) -> (i32, i32) {
    %c0_i32 = arith.constant 0 : i32
    %c0_i32_0 = arith.constant 0 : i32
    %c0_i32_1 = arith.constant 0 : i32
    return %c0_i32, %c0_i32_0 : i32, i32
  }
  func.func @transform_6(%arg0: i32) -> (i32, i32) {
    %c0_i32 = arith.constant 0 : i32
    %c0_i32_0 = arith.constant 0 : i32
    %c0_i32_1 = arith.constant 0 : i32
    return %c0_i32, %c0_i32_0 : i32, i32
  }
  func.func @transform_7(%arg0: i32) -> (i32, i32, i32) {
    %c0_i32 = arith.constant 0 : i32
    %c0_i32_0 = arith.constant 0 : i32
    %c0_i32_1 = arith.constant 0 : i32
    return %arg0, %c0_i32, %c0_i32_0 : i32, i32, i32
  }
}

</mosaic_0001>

<llo_original>
// kernel: chess_value_network.3
$region0: #{chess_value_network.3}
  #allocation0 [shape = 'u32[]', space=smem, size = 0x4, offset = 0x4, fixed_abs, tag = 'smem constant byte address 0x4 - core index']
  #allocation1 [shape = 'u32[144,128]{1,0:T(1,128)}', space=vmem, size = 0x12000, scoped, tag = 'internal scratch']
  #allocation2 [shape = 'f32[1,1]{1,0:T(1,128)S(1)}', space=vmem, size = 0x200, scoped, tag = 'scoped memory for chess_value_network.3']
  %s0 = inlined_call_operand.vmem [shape: f32[80,768], index: 0, kind: input, shape index: {}]
  %s1 = inlined_call_operand.vmem [shape: bf16[768,256], index: 1, kind: input, shape index: {}]
  %s2 = inlined_call_operand.vmem [shape: f32[1,256], index: 2, kind: input, shape index: {}]
  %s3 = inlined_call_operand.vmem [shape: bf16[256,128], index: 3, kind: input, shape index: {}]
  %s4 = inlined_call_operand.vmem [shape: f32[1,128], index: 4, kind: input, shape index: {}]
  %s5 = inlined_call_operand.vmem [shape: f32[1,128], index: 5, kind: input, shape index: {}]
  %s6 = inlined_call_operand.<no memory space> [shape: f32[1,1], index: 6, kind: input, shape index: {}]
  %s7 = inlined_call_operand.vmem [shape: f32[1,1,80], index: 7, kind: output, shape index: {}]
  %s8 = sld [smem:[#allocation0]]
  $region38: #{chess_value_network.3} parent=0
    _
  %s10 = ssub.s32 1, %s8
  %s11 = scalar_select 0, %s10, %s8
  %v12 = vstv %s6
  %13 = vst [vmem:[#allocation2] sm:$0x1] %v12
  // Predicated region
  $region2: #{chess_value_network.3} parent=0 // pred_check
    _
  $region3: #{chess_value_network.3} parent=0 // pred_check_branch
    %15 = sbr.rel (0) target = $region5
  $region4: #{chess_value_network.3} parent=0 // pred_region
    _
  $region5: #{chess_value_network.3} parent=0 // pred_fallthru
    _
  // Predicated region
  $region6: #{chess_value_network.3} parent=0 // pred_check
    _
  $region7: #{chess_value_network.3} parent=0 // pred_check_branch
    %17 = sbr.rel (0) target = $region9
  $region8: #{chess_value_network.3} parent=0 // pred_region
    _
  $region9: #{chess_value_network.3} parent=0 // pred_fallthru
    _
  // Predicated region
  $region10: #{chess_value_network.3} parent=0 // pred_check
    _
  $region11: #{chess_value_network.3} parent=0 // pred_check_branch
    %19 = sbr.rel (0) target = $region13
  $region12: #{chess_value_network.3} parent=0 // pred_region
    _
  $region13: #{chess_value_network.3} parent=0 // pred_fallthru
    _
  // Predicated region
  $region14: #{chess_value_network.3} parent=0 // pred_check
    _
  $region15: #{chess_value_network.3} parent=0 // pred_check_branch
    %21 = sbr.rel (0) target = $region17
  $region16: #{chess_value_network.3} parent=0 // pred_region
    _
  $region17: #{chess_value_network.3} parent=0 // pred_fallthru
    _
  // Predicated region
  $region18: #{chess_value_network.3} parent=0 // pred_check
    _
  $region19: #{chess_value_network.3} parent=0 // pred_check_branch
    %23 = sbr.rel (0) target = $region21
  $region20: #{chess_value_network.3} parent=0 // pred_region
    _
  $region21: #{chess_value_network.3} parent=0 // pred_fallthru
    _
  // Predicated region
  $region22: #{chess_value_network.3} parent=0 // pred_check
    _
  $region23: #{chess_value_network.3} parent=0 // pred_check_branch
    %25 = sbr.rel (0) target = $region25
  $region24: #{chess_value_network.3} parent=0 // pred_region
    _
  $region25: #{chess_value_network.3} parent=0 // pred_fallthru
    _
  // Predicated region
  $region26: #{chess_value_network.3} parent=0 // pred_check
    _
  $region27: #{chess_value_network.3} parent=0 // pred_check_branch
    %27 = sbr.rel (0) target = $region29
  $region28: #{chess_value_network.3} parent=0 // pred_region
    _
  $region29: #{chess_value_network.3} parent=0 // pred_fallthru
    _
  %v29 = vld [vmem:[%s0] sm:$0xff]
  %v30 = vld [vmem:[%s0 + $0x8] sm:$0xff]
  %v31 = vld [vmem:[%s0 + $0x10] sm:$0xff]
  %v32 = vld [vmem:[%s0 + $0x18] sm:$0xff]
  %v33 = vld [vmem:[%s0 + $0x20] sm:$0xff]
  %v34 = vld [vmem:[%s0 + $0x28] sm:$0xff]
  %v35 = vld [vmem:[%s0 + $0x30] sm:$0xff]
  %v36 = vld [vmem:[%s0 + $0x38] sm:$0xff]
  %v37 = vld [vmem:[%s0 + $0x40] sm:$0xff]
  %v38 = vld [vmem:[%s0 + $0x48] sm:$0xff]
  %v39 = vld [vmem:[%s0 + $0x50] sm:$0xff]
  %v40 = vld [vmem:[%s0 + $0x58] sm:$0xff]
  %v41 = vld [vmem:[%s0 + $0x60] sm:$0xff]
  %v42 = vld [vmem:[%s0 + $0x68] sm:$0xff]
  %v43 = vld [vmem:[%s0 + $0x70] sm:$0xff]
  %v44 = vld [vmem:[%s0 + $0x78] sm:$0xff]
  %v45 = vld [vmem:[%s0 + $0x80] sm:$0xff]
  %v46 = vld [vmem:[%s0 + $0x88] sm:$0xff]
  %v47 = vld [vmem:[%s0 + $0x90] sm:$0xff]
  %v48 = vld [vmem:[%s0 + $0x98] sm:$0xff]
  %v49 = vld [vmem:[%s0 + $0xa0] sm:$0xff]
  %v50 = vld [vmem:[%s0 + $0xa8] sm:$0xff]
  %v51 = vld [vmem:[%s0 + $0xb0] sm:$0xff]
  %v52 = vld [vmem:[%s0 + $0xb8] sm:$0xff]
  %v53 = vld [vmem:[%s0 + $0xc0] sm:$0xff]
  %v54 = vld [vmem:[%s0 + $0xc8] sm:$0xff]
  %v55 = vld [vmem:[%s0 + $0xd0] sm:$0xff]
  %v56 = vld [vmem:[%s0 + $0xd8] sm:$0xff]
  %v57 = vld [vmem:[%s0 + $0xe0] sm:$0xff]
  %v58 = vld [vmem:[%s0 + $0xe8] sm:$0xff]
  %v59 = vld [vmem:[%s0 + $0xf0] sm:$0xff]
  %v60 = vld [vmem:[%s0 + $0xf8] sm:$0xff]
  %v61 = vld [vmem:[%s0 + $0x100] sm:$0xff]
  %v62 = vld [vmem:[%s0 + $0x108] sm:$0xff]
  %v63 = vld [vmem:[%s0 + $0x110] sm:$0xff]
  %v64 = vld [vmem:[%s0 + $0x118] sm:$0xff]
  %v65 = vld [vmem:[%s0 + $0x120] sm:$0xff]
  %v66 = vld [vmem:[%s0 + $0x128] sm:$0xff]
  %v67 = vld [vmem:[%s0 + $0x130] sm:$0xff]
  %v68 = vld [vmem:[%s0 + $0x138] sm:$0xff]
  %v69 = vld [vmem:[%s0 + $0x140] sm:$0xff]
  %v70 = vld [vmem:[%s0 + $0x148] sm:$0xff]
  %v71 = vld [vmem:[%s0 + $0x150] sm:$0xff]
  %v72 = vld [vmem:[%s0 + $0x158] sm:$0xff]
  %v73 = vld [vmem:[%s0 + $0x160] sm:$0xff]
  %v74 = vld [vmem:[%s0 + $0x168] sm:$0xff]
  %v75 = vld [vmem:[%s0 + $0x170] sm:$0xff]
  %v76 = vld [vmem:[%s0 + $0x178] sm:$0xff]
  %v77 = vld [vmem:[%s0 + $0x180] sm:$0xff]
  %v78 = vld [vmem:[%s0 + $0x188] sm:$0xff]
  %v79 = vld [vmem:[%s0 + $0x190] sm:$0xff]
  %v80 = vld [vmem:[%s0 + $0x198] sm:$0xff]
  %v81 = vld [vmem:[%s0 + $0x1a0] sm:$0xff]
  %v82 = vld [vmem:[%s0 + $0x1a8] sm:$0xff]
  %v83 = vld [vmem:[%s0 + $0x1b0] sm:$0xff]
  %v84 = vld [vmem:[%s0 + $0x1b8] sm:$0xff]
  %v85 = vld [vmem:[%s0 + $0x1c0] sm:$0xff]
  %v86 = vld [vmem:[%s0 + $0x1c8] sm:$0xff]
  %v87 = vld [vmem:[%s0 + $0x1d0] sm:$0xff]
  %v88 = vld [vmem:[%s0 + $0x1d8] sm:$0xff]
  %v89 = vpack.c.bf16 %v35, %v29
  %v90 = vpack.c.bf16 %v36, %v30
  %v91 = vpack.c.bf16 %v37, %v31
  %v92 = vpack.c.bf16 %v38, %v32
  %v93 = vpack.c.bf16 %v39, %v33
  %v94 = vpack.c.bf16 %v40, %v34
  %v95 = vpack.c.bf16 %v47, %v41
  %v96 = vpack.c.bf16 %v48, %v42
  %v97 = vpack.c.bf16 %v49, %v43
  %v98 = vpack.c.bf16 %v50, %v44
  %v99 = vpack.c.bf16 %v51, %v45
  %v100 = vpack.c.bf16 %v52, %v46
  %v101 = vpack.c.bf16 %v59, %v53
  %v102 = vpack.c.bf16 %v60, %v54
  %v103 = vpack.c.bf16 %v61, %v55
  %v104 = vpack.c.bf16 %v62, %v56
  %v105 = vpack.c.bf16 %v63, %v57
  %v106 = vpack.c.bf16 %v64, %v58
  %v107 = vpack.c.bf16 %v71, %v65
  %v108 = vpack.c.bf16 %v72, %v66
  %v109 = vpack.c.bf16 %v73, %v67
  %v110 = vpack.c.bf16 %v74, %v68
  %v111 = vpack.c.bf16 %v75, %v69
  %v112 = vpack.c.bf16 %v76, %v70
  %v113 = vpack.c.bf16 %v83, %v77
  %v114 = vpack.c.bf16 %v84, %v78
  %v115 = vpack.c.bf16 %v85, %v79
  %v116 = vpack.c.bf16 %v86, %v80
  %v117 = vpack.c.bf16 %v87, %v81
  %v118 = vpack.c.bf16 %v88, %v82
  %v119 = vld [vmem:[%s1] sm:$0xff]
  %v120 = vld [vmem:[%s1 + $0x8] sm:$0xff]
  %v121 = vld [vmem:[%s1 + $0x10] sm:$0xff]
  %v122 = vld [vmem:[%s1 + $0x18] sm:$0xff]
  %v123 = vld [vmem:[%s1 + $0x20] sm:$0xff]
  %v124 = vld [vmem:[%s1 + $0x28] sm:$0xff]
  %v125 = vld [vmem:[%s1 + $0x30] sm:$0xff]
  %v126 = vld [vmem:[%s1 + $0x38] sm:$0xff]
  %v127 = vld [vmem:[%s1 + $0x40] sm:$0xff]
  %v128 = vld [vmem:[%s1 + $0x48] sm:$0xff]
  %v129 = vld [vmem:[%s1 + $0x50] sm:$0xff]
  %v130 = vld [vmem:[%s1 + $0x58] sm:$0xff]
  %v131 = vld [vmem:[%s1 + $0x60] sm:$0xff]
  %v132 = vld [vmem:[%s1 + $0x68] sm:$0xff]
  %v133 = vld [vmem:[%s1 + $0x70] sm:$0xff]
  %v134 = vld [vmem:[%s1 + $0x78] sm:$0xff]
  %v135 = vld [vmem:[%s1 + $0x80] sm:$0xff]
  %v136 = vld [vmem:[%s1 + $0x88] sm:$0xff]
  %v137 = vld [vmem:[%s1 + $0x90] sm:$0xff]
  %v138 = vld [vmem:[%s1 + $0x98] sm:$0xff]
  %v139 = vld [vmem:[%s1 + $0xa0] sm:$0xff]
  %v140 = vld [vmem:[%s1 + $0xa8] sm:$0xff]
  %v141 = vld [vmem:[%s1 + $0xb0] sm:$0xff]
  %v142 = vld [vmem:[%s1 + $0xb8] sm:$0xff]
  %v143 = vld [vmem:[%s1 + $0xc0] sm:$0xff]
  %v144 = vld [vmem:[%s1 + $0xc8] sm:$0xff]
  %v145 = vld [vmem:[%s1 + $0xd0] sm:$0xff]
  %v146 = vld [vmem:[%s1 + $0xd8] sm:$0xff]
  %v147 = vld [vmem:[%s1 + $0xe0] sm:$0xff]
  %v148 = vld [vmem:[%s1 + $0xe8] sm:$0xff]
  %v149 = vld [vmem:[%s1 + $0xf0] sm:$0xff]
  %v150 = vld [vmem:[%s1 + $0xf8] sm:$0xff]
  %v151 = vld [vmem:[%s1 + $0x100] sm:$0xff]
  %v152 = vld [vmem:[%s1 + $0x108] sm:$0xff]
  %v153 = vld [vmem:[%s1 + $0x110] sm:$0xff]
  %v154 = vld [vmem:[%s1 + $0x118] sm:$0xff]
  %v155 = vld [vmem:[%s1 + $0x120] sm:$0xff]
  %v156 = vld [vmem:[%s1 + $0x128] sm:$0xff]
  %v157 = vld [vmem:[%s1 + $0x130] sm:$0xff]
  %v158 = vld [vmem:[%s1 + $0x138] sm:$0xff]
  %v159 = vld [vmem:[%s1 + $0x140] sm:$0xff]
  %v160 = vld [vmem:[%s1 + $0x148] sm:$0xff]
  %v161 = vld [vmem:[%s1 + $0x150] sm:$0xff]
  %v162 = vld [vmem:[%s1 + $0x158] sm:$0xff]
  %v163 = vld [vmem:[%s1 + $0x160] sm:$0xff]
  %v164 = vld [vmem:[%s1 + $0x168] sm:$0xff]
  %v165 = vld [vmem:[%s1 + $0x170] sm:$0xff]
  %v166 = vld [vmem:[%s1 + $0x178] sm:$0xff]
  %v167 = vld [vmem:[%s1 + $0x180] sm:$0xff]
  %v168 = vld [vmem:[%s1 + $0x188] sm:$0xff]
  %v169 = vld [vmem:[%s1 + $0x190] sm:$0xff]
  %v170 = vld [vmem:[%s1 + $0x198] sm:$0xff]
  %v171 = vld [vmem:[%s1 + $0x1a0] sm:$0xff]
  %v172 = vld [vmem:[%s1 + $0x1a8] sm:$0xff]
  %v173 = vld [vmem:[%s1 + $0x1b0] sm:$0xff]
  %v174 = vld [vmem:[%s1 + $0x1b8] sm:$0xff]
  %v175 = vld [vmem:[%s1 + $0x1c0] sm:$0xff]
  %v176 = vld [vmem:[%s1 + $0x1c8] sm:$0xff]
  %v177 = vld [vmem:[%s1 + $0x1d0] sm:$0xff]
  %v178 = vld [vmem:[%s1 + $0x1d8] sm:$0xff]
  %v179 = vld [vmem:[%s1 + $0x1e0] sm:$0xff]
  %v180 = vld [vmem:[%s1 + $0x1e8] sm:$0xff]
  %v181 = vld [vmem:[%s1 + $0x1f0] sm:$0xff]
  %v182 = vld [vmem:[%s1 + $0x1f8] sm:$0xff]
  %v183 = vld [vmem:[%s1 + $0x200] sm:$0xff]
  %v184 = vld [vmem:[%s1 + $0x208] sm:$0xff]
  %v185 = vld [vmem:[%s1 + $0x210] sm:$0xff]
  %v186 = vld [vmem:[%s1 + $0x218] sm:$0xff]
  %v187 = vld [vmem:[%s1 + $0x220] sm:$0xff]
  %v188 = vld [vmem:[%s1 + $0x228] sm:$0xff]
  %v189 = vld [vmem:[%s1 + $0x230] sm:$0xff]
  %v190 = vld [vmem:[%s1 + $0x238] sm:$0xff]
  %v191 = vld [vmem:[%s1 + $0x240] sm:$0xff]
  %v192 = vld [vmem:[%s1 + $0x248] sm:$0xff]
  %v193 = vld [vmem:[%s1 + $0x250] sm:$0xff]
  %v194 = vld [vmem:[%s1 + $0x258] sm:$0xff]
  %v195 = vld [vmem:[%s1 + $0x260] sm:$0xff]
  %v196 = vld [vmem:[%s1 + $0x268] sm:$0xff]
  %v197 = vld [vmem:[%s1 + $0x270] sm:$0xff]
  %v198 = vld [vmem:[%s1 + $0x278] sm:$0xff]
  %v199 = vld [vmem:[%s1 + $0x280] sm:$0xff]
  %v200 = vld [vmem:[%s1 + $0x288] sm:$0xff]
  %v201 = vld [vmem:[%s1 + $0x290] sm:$0xff]
  %v202 = vld [vmem:[%s1 + $0x298] sm:$0xff]
  %v203 = vld [vmem:[%s1 + $0x2a0] sm:$0xff]
  %v204 = vld [vmem:[%s1 + $0x2a8] sm:$0xff]
  %v205 = vld [vmem:[%s1 + $0x2b0] sm:$0xff]
  %v206 = vld [vmem:[%s1 + $0x2b8] sm:$0xff]
  %v207 = vld [vmem:[%s1 + $0x2c0] sm:$0xff]
  %v208 = vld [vmem:[%s1 + $0x2c8] sm:$0xff]
  %v209 = vld [vmem:[%s1 + $0x2d0] sm:$0xff]
  %v210 = vld [vmem:[%s1 + $0x2d8] sm:$0xff]
  %v211 = vld [vmem:[%s1 + $0x2e0] sm:$0xff]
  %v212 = vld [vmem:[%s1 + $0x2e8] sm:$0xff]
  %v213 = vld [vmem:[%s1 + $0x2f0] sm:$0xff]
  %v214 = vld [vmem:[%s1 + $0x2f8] sm:$0xff]
  %v215 = vld [vmem:[%s2] sm:$0x3]
  %v217 = vlaneseq
  %v218 = vshrl.u32 %v217, 7
  %v219 = vsub.s32 0, %v218
  %v220 = vrot.slane %v215, %v219
  %v221 = vlaneseq
  %v222 = vshrl.u32 %v221, 7
  %v223 = vsub.s32 1, %v222
  %v224 = vrot.slane %v215, %v223
  %v323 = vunpack.c.l.b16 %v119
  %v324 = vunpack.c.h.b16 %v119
  %v325 = vunpack.c.l.b16 %v120
  %v326 = vunpack.c.h.b16 %v120
  %v327 = vunpack.c.l.b16 %v121
  %v328 = vunpack.c.h.b16 %v121
  %v329 = vunpack.c.l.b16 %v122
  %v330 = vunpack.c.h.b16 %v122
  %v331 = vunpack.c.l.b16 %v123
  %v332 = vunpack.c.h.b16 %v123
  %v333 = vunpack.c.l.b16 %v124
  %v334 = vunpack.c.h.b16 %v124
  %v335 = vunpack.c.l.b16 %v125
  %v336 = vunpack.c.h.b16 %v125
  %v337 = vunpack.c.l.b16 %v126
  %v338 = vunpack.c.h.b16 %v126
  %v339 = vunpack.c.l.b16 %v127
  %v340 = vunpack.c.h.b16 %v127
  %v341 = vunpack.c.l.b16 %v128
  %v342 = vunpack.c.h.b16 %v128
  %v343 = vunpack.c.l.b16 %v129
  %v344 = vunpack.c.h.b16 %v129
  %v345 = vunpack.c.l.b16 %v130
  %v346 = vunpack.c.h.b16 %v130
  %v347 = vunpack.c.l.b16 %v131
  %v348 = vunpack.c.h.b16 %v131
  %v349 = vunpack.c.l.b16 %v132
  %v350 = vunpack.c.h.b16 %v132
  %v351 = vunpack.c.l.b16 %v133
  %v352 = vunpack.c.h.b16 %v133
  %v353 = vunpack.c.l.b16 %v134
  %v354 = vunpack.c.h.b16 %v134
  %v355 = vunpack.c.l.b16 %v135
  %v356 = vunpack.c.h.b16 %v135
  %v357 = vunpack.c.l.b16 %v136
  %v358 = vunpack.c.h.b16 %v136
  %v359 = vunpack.c.l.b16 %v137
  %v360 = vunpack.c.h.b16 %v137
  %v361 = vunpack.c.l.b16 %v138
  %v362 = vunpack.c.h.b16 %v138
  %v363 = vunpack.c.l.b16 %v139
  %v364 = vunpack.c.h.b16 %v139
  %v365 = vunpack.c.l.b16 %v140
  %v366 = vunpack.c.h.b16 %v140
  %v367 = vunpack.c.l.b16 %v141
  %v368 = vunpack.c.h.b16 %v141
  %v369 = vunpack.c.l.b16 %v142
  %v370 = vunpack.c.h.b16 %v142
  %v371 = vunpack.c.l.b16 %v143
  %v372 = vunpack.c.h.b16 %v143
  %v373 = vunpack.c.l.b16 %v144
  %v374 = vunpack.c.h.b16 %v144
  %v375 = vunpack.c.l.b16 %v145
  %v376 = vunpack.c.h.b16 %v145
  %v377 = vunpack.c.l.b16 %v146
  %v378 = vunpack.c.h.b16 %v146
  %v379 = vunpack.c.l.b16 %v147
  %v380 = vunpack.c.h.b16 %v147
  %v381 = vunpack.c.l.b16 %v148
  %v382 = vunpack.c.h.b16 %v148
  %v383 = vunpack.c.l.b16 %v149
  %v384 = vunpack.c.h.b16 %v149
  %v385 = vunpack.c.l.b16 %v150
  %v386 = vunpack.c.h.b16 %v150
  %v387 = vunpack.c.l.b16 %v151
  %v388 = vunpack.c.h.b16 %v151
  %v389 = vunpack.c.l.b16 %v152
  %v390 = vunpack.c.h.b16 %v152
  %v391 = vunpack.c.l.b16 %v153
  %v392 = vunpack.c.h.b16 %v153
  %v393 = vunpack.c.l.b16 %v154
  %v394 = vunpack.c.h.b16 %v154
  %v395 = vunpack.c.l.b16 %v155
  %v396 = vunpack.c.h.b16 %v155
  %v397 = vunpack.c.l.b16 %v156
  %v398 = vunpack.c.h.b16 %v156
  %v399 = vunpack.c.l.b16 %v157
  %v400 = vunpack.c.h.b16 %v157
  %v401 = vunpack.c.l.b16 %v158
  %v402 = vunpack.c.h.b16 %v158
  %v403 = vunpack.c.l.b16 %v159
  %v404 = vunpack.c.h.b16 %v159
  %v405 = vunpack.c.l.b16 %v160
  %v406 = vunpack.c.h.b16 %v160
  %v407 = vunpack.c.l.b16 %v161
  %v408 = vunpack.c.h.b16 %v161
  %v409 = vunpack.c.l.b16 %v162
  %v410 = vunpack.c.h.b16 %v162
  %v411 = vunpack.c.l.b16 %v163
  %v412 = vunpack.c.h.b16 %v163
  %v413 = vunpack.c.l.b16 %v164
  %v414 = vunpack.c.h.b16 %v164
  %v415 = vunpack.c.l.b16 %v165
  %v416 = vunpack.c.h.b16 %v165
  %v417 = vunpack.c.l.b16 %v166
  %v418 = vunpack.c.h.b16 %v166
  %v419 = vunpack.c.l.b16 %v167
  %v420 = vunpack.c.h.b16 %v167
  %v421 = vunpack.c.l.b16 %v168
  %v422 = vunpack.c.h.b16 %v168
  %v423 = vunpack.c.l.b16 %v169
  %v424 = vunpack.c.h.b16 %v169
  %v425 = vunpack.c.l.b16 %v170
  %v426 = vunpack.c.h.b16 %v170
  %v427 = vunpack.c.l.b16 %v171
  %v428 = vunpack.c.h.b16 %v171
  %v429 = vunpack.c.l.b16 %v172
  %v430 = vunpack.c.h.b16 %v172
  %v431 = vunpack.c.l.b16 %v173
  %v432 = vunpack.c.h.b16 %v173
  %v433 = vunpack.c.l.b16 %v174
  %v434 = vunpack.c.h.b16 %v174
  %v435 = vunpack.c.l.b16 %v175
  %v436 = vunpack.c.h.b16 %v175
  %v437 = vunpack.c.l.b16 %v176
  %v438 = vunpack.c.h.b16 %v176
  %v439 = vunpack.c.l.b16 %v177
  %v440 = vunpack.c.h.b16 %v177
  %v441 = vunpack.c.l.b16 %v178
  %v442 = vunpack.c.h.b16 %v178
  %v443 = vunpack.c.l.b16 %v179
  %v444 = vunpack.c.h.b16 %v179
  %v445 = vunpack.c.l.b16 %v180
  %v446 = vunpack.c.h.b16 %v180
  %v447 = vunpack.c.l.b16 %v181
  %v448 = vunpack.c.h.b16 %v181
  %v449 = vunpack.c.l.b16 %v182
  %v450 = vunpack.c.h.b16 %v182
  %v451 = vunpack.c.l.b16 %v183
  %v452 = vunpack.c.h.b16 %v183
  %v453 = vunpack.c.l.b16 %v184
  %v454 = vunpack.c.h.b16 %v184
  %v455 = vunpack.c.l.b16 %v185
  %v456 = vunpack.c.h.b16 %v185
  %v457 = vunpack.c.l.b16 %v186
  %v458 = vunpack.c.h.b16 %v186
  %v459 = vunpack.c.l.b16 %v187
  %v460 = vunpack.c.h.b16 %v187
  %v461 = vunpack.c.l.b16 %v188
  %v462 = vunpack.c.h.b16 %v188
  %v463 = vunpack.c.l.b16 %v189
  %v464 = vunpack.c.h.b16 %v189
  %v465 = vunpack.c.l.b16 %v190
  %v466 = vunpack.c.h.b16 %v190
  %v467 = vunpack.c.l.b16 %v191
  %v468 = vunpack.c.h.b16 %v191
  %v469 = vunpack.c.l.b16 %v192
  %v470 = vunpack.c.h.b16 %v192
  %v471 = vunpack.c.l.b16 %v193
  %v472 = vunpack.c.h.b16 %v193
  %v473 = vunpack.c.l.b16 %v194
  %v474 = vunpack.c.h.b16 %v194
  %v475 = vunpack.c.l.b16 %v195
  %v476 = vunpack.c.h.b16 %v195
  %v477 = vunpack.c.l.b16 %v196
  %v478 = vunpack.c.h.b16 %v196
  %v479 = vunpack.c.l.b16 %v197
  %v480 = vunpack.c.h.b16 %v197
  %v481 = vunpack.c.l.b16 %v198
  %v482 = vunpack.c.h.b16 %v198
  %v483 = vunpack.c.l.b16 %v199
  %v484 = vunpack.c.h.b16 %v199
  %v485 = vunpack.c.l.b16 %v200
  %v486 = vunpack.c.h.b16 %v200
  %v487 = vunpack.c.l.b16 %v201
  %v488 = vunpack.c.h.b16 %v201
  %v489 = vunpack.c.l.b16 %v202
  %v490 = vunpack.c.h.b16 %v202
  %v491 = vunpack.c.l.b16 %v203
  %v492 = vunpack.c.h.b16 %v203
  %v493 = vunpack.c.l.b16 %v204
  %v494 = vunpack.c.h.b16 %v204
  %v495 = vunpack.c.l.b16 %v205
  %v496 = vunpack.c.h.b16 %v205
  %v497 = vunpack.c.l.b16 %v206
  %v498 = vunpack.c.h.b16 %v206
  %v499 = vunpack.c.l.b16 %v207
  %v500 = vunpack.c.h.b16 %v207
  %v501 = vunpack.c.l.b16 %v208
  %v502 = vunpack.c.h.b16 %v208
  %v503 = vunpack.c.l.b16 %v209
  %v504 = vunpack.c.h.b16 %v209
  %v505 = vunpack.c.l.b16 %v210
  %v506 = vunpack.c.h.b16 %v210
  %v507 = vunpack.c.l.b16 %v211
  %v508 = vunpack.c.h.b16 %v211
  %v509 = vunpack.c.l.b16 %v212
  %v510 = vunpack.c.h.b16 %v212
  %v511 = vunpack.c.l.b16 %v213
  %v512 = vunpack.c.h.b16 %v213
  %v513 = vunpack.c.l.b16 %v214
  %v514 = vunpack.c.h.b16 %v214
  %v515 = vpack.c.b16 %v325, %v323
  %v516 = vpack.c.b16 %v326, %v324
  %v517 = vpack.c.b16 %v329, %v327
  %v518 = vpack.c.b16 %v330, %v328
  %v519 = vpack.c.b16 %v333, %v331
  %v520 = vpack.c.b16 %v334, %v332
  %v521 = vpack.c.b16 %v337, %v335
  %v522 = vpack.c.b16 %v338, %v336
  %v523 = vpack.c.b16 %v341, %v339
  %v524 = vpack.c.b16 %v342, %v340
  %v525 = vpack.c.b16 %v345, %v343
  %v526 = vpack.c.b16 %v346, %v344
  %v527 = vpack.c.b16 %v349, %v347
  %v528 = vpack.c.b16 %v350, %v348
  %v529 = vpack.c.b16 %v353, %v351
  %v530 = vpack.c.b16 %v354, %v352
  %v531 = vpack.c.b16 %v357, %v355
  %v532 = vpack.c.b16 %v358, %v356
  %v533 = vpack.c.b16 %v361, %v359
  %v534 = vpack.c.b16 %v362, %v360
  %v535 = vpack.c.b16 %v365, %v363
  %v536 = vpack.c.b16 %v366, %v364
  %v537 = vpack.c.b16 %v369, %v367
  %v538 = vpack.c.b16 %v370, %v368
  %v539 = vpack.c.b16 %v373, %v371
  %v540 = vpack.c.b16 %v374, %v372
  %v541 = vpack.c.b16 %v377, %v375
  %v542 = vpack.c.b16 %v378, %v376
  %v543 = vpack.c.b16 %v381, %v379
  %v544 = vpack.c.b16 %v382, %v380
  %v545 = vpack.c.b16 %v385, %v383
  %v546 = vpack.c.b16 %v386, %v384
  %v547 = vpack.c.b16 %v389, %v387
  %v548 = vpack.c.b16 %v390, %v388
  %v549 = vpack.c.b16 %v393, %v391
  %v550 = vpack.c.b16 %v394, %v392
  %v551 = vpack.c.b16 %v397, %v395
  %v552 = vpack.c.b16 %v398, %v396
  %v553 = vpack.c.b16 %v401, %v399
  %v554 = vpack.c.b16 %v402, %v400
  %v555 = vpack.c.b16 %v405, %v403
  %v556 = vpack.c.b16 %v406, %v404
  %v557 = vpack.c.b16 %v409, %v407
  %v558 = vpack.c.b16 %v410, %v408
  %v559 = vpack.c.b16 %v413, %v411
  %v560 = vpack.c.b16 %v414, %v412
  %v561 = vpack.c.b16 %v417, %v415
  %v562 = vpack.c.b16 %v418, %v416
  %v563 = vpack.c.b16 %v421, %v419
  %v564 = vpack.c.b16 %v422, %v420
  %v565 = vpack.c.b16 %v425, %v423
  %v566 = vpack.c.b16 %v426, %v424
  %v567 = vpack.c.b16 %v429, %v427
  %v568 = vpack.c.b16 %v430, %v428
  %v569 = vpack.c.b16 %v433, %v431
  %v570 = vpack.c.b16 %v434, %v432
  %v571 = vpack.c.b16 %v437, %v435
  %v572 = vpack.c.b16 %v438, %v436
  %v573 = vpack.c.b16 %v441, %v439
  %v574 = vpack.c.b16 %v442, %v440
  %v575 = vpack.c.b16 %v445, %v443
  %v576 = vpack.c.b16 %v446, %v444
  %v577 = vpack.c.b16 %v449, %v447
  %v578 = vpack.c.b16 %v450, %v448
  %v579 = vpack.c.b16 %v453, %v451
  %v580 = vpack.c.b16 %v454, %v452
  %v581 = vpack.c.b16 %v457, %v455
  %v582 = vpack.c.b16 %v458, %v456
  %v583 = vpack.c.b16 %v461, %v459
  %v584 = vpack.c.b16 %v462, %v460
  %v585 = vpack.c.b16 %v465, %v463
  %v586 = vpack.c.b16 %v466, %v464
  %v587 = vpack.c.b16 %v469, %v467
  %v588 = vpack.c.b16 %v470, %v468
  %v589 = vpack.c.b16 %v473, %v471
  %v590 = vpack.c.b16 %v474, %v472
  %v591 = vpack.c.b16 %v477, %v475
  %v592 = vpack.c.b16 %v478, %v476
  %v593 = vpack.c.b16 %v481, %v479
  %v594 = vpack.c.b16 %v482, %v480
  %v595 = vpack.c.b16 %v485, %v483
  %v596 = vpack.c.b16 %v486, %v484
  %v597 = vpack.c.b16 %v489, %v487
  %v598 = vpack.c.b16 %v490, %v488
  %v599 = vpack.c.b16 %v493, %v491
  %v600 = vpack.c.b16 %v494, %v492
  %v601 = vpack.c.b16 %v497, %v495
  %v602 = vpack.c.b16 %v498, %v496
  %v603 = vpack.c.b16 %v501, %v499
  %v604 = vpack.c.b16 %v502, %v500
  %v605 = vpack.c.b16 %v505, %v503
  %v606 = vpack.c.b16 %v506, %v504
  %v607 = vpack.c.b16 %v509, %v507
  %v608 = vpack.c.b16 %v510, %v508
  %v609 = vpack.c.b16 %v513, %v511
  %v610 = vpack.c.b16 %v514, %v512
  %707 = vmatprep.subr.bf16.mxu0 %v516
  %708 = vmatpush1.bf16.msra.mxu0 %v515
  %709 = vmatprep.subr.bf16.mxu0 %v518
  %710 = vmatpush1.bf16.msra.mxu0 %v517
  %711 = vmatprep.subr.bf16.mxu0 %v520
  %712 = vmatpush1.bf16.msra.mxu0 %v519
  %713 = vmatprep.subr.bf16.mxu0 %v522
  %714 = vmatpush1.bf16.msra.mxu0 %v521
  %715 = vmatprep.subr.bf16.mxu0 %v524
  %716 = vmatpush1.bf16.msra.mxu0 %v523
  %717 = vmatprep.subr.bf16.mxu0 %v526
  %718 = vmatpush1.bf16.msra.mxu0 %v525
  %719 = vmatprep.subr.bf16.mxu0 %v528
  %720 = vmatpush1.bf16.msra.mxu0 %v527
  %721 = vmatprep.subr.bf16.mxu0 %v530
  %722 = vmatpush1.bf16.msra.mxu0 %v529
  %723 = vmatprep.subr.bf16.mxu0 %v532
  %724 = vmatpush1.bf16.msra.mxu0 %v531
  %725 = vmatprep.subr.bf16.mxu0 %v534
  %726 = vmatpush1.bf16.msra.mxu0 %v533
  %727 = vmatprep.subr.bf16.mxu0 %v536
  %728 = vmatpush1.bf16.msra.mxu0 %v535
  %729 = vmatprep.subr.bf16.mxu0 %v538
  %730 = vmatpush1.bf16.msra.mxu0 %v537
  %731 = vmatprep.subr.bf16.mxu0 %v540
  %732 = vmatpush1.bf16.msra.mxu0 %v539
  %733 = vmatprep.subr.bf16.mxu0 %v542
  %734 = vmatpush1.bf16.msra.mxu0 %v541
  %735 = vmatprep.subr.bf16.mxu0 %v544
  %736 = vmatpush1.bf16.msra.mxu0 %v543
  %737 = vmatprep.subr.bf16.mxu0 %v546
  %738 = vmatpush1.bf16.msra.mxu0 %v545
  %739 = vmatprep.mubr.bf16.mxu0 %v90
  %740 = vmatmul.mubr.bf16.gmra.mrb[0].mxu0 %v89
  %v741 = vpop.f32.mrb[0].mxu0
  %v742 = vadd.f32 %v220, %v741
  %v743 = vpop.f32.mrb[0].mxu0
  %v744 = vadd.f32 %v224, %v743
  %v745 = vpop.f32.mrb[0].mxu0
  %v746 = vadd.f32 %v220, %v745
  %v747 = vpop.f32.mrb[0].mxu0
  %v748 = vadd.f32 %v224, %v747
  %749 = vmatprep.mubr.bf16.mxu0 %v96
  %750 = vmatmul.mubr.bf16.gmra.mrb[0].mxu0 %v95
  %v751 = vpop.f32.mrb[0].mxu0
  %v752 = vadd.f32 %v220, %v751
  %v753 = vpop.f32.mrb[0].mxu0
  %v754 = vadd.f32 %v224, %v753
  %v755 = vpop.f32.mrb[0].mxu0
  %v756 = vadd.f32 %v220, %v755
  %v757 = vpop.f32.mrb[0].mxu0
  %v758 = vadd.f32 %v224, %v757
  %759 = vmatprep.mubr.bf16.mxu0 %v102
  %760 = vmatmul.mubr.bf16.gmra.mrb[0].mxu0 %v101
  %v761 = vpop.f32.mrb[0].mxu0
  %v762 = vadd.f32 %v220, %v761
  %v763 = vpop.f32.mrb[0].mxu0
  %v764 = vadd.f32 %v224, %v763
  %v765 = vpop.f32.mrb[0].mxu0
  %v766 = vadd.f32 %v220, %v765
  %v767 = vpop.f32.mrb[0].mxu0
  %v768 = vadd.f32 %v224, %v767
  %769 = vmatprep.mubr.bf16.mxu0 %v108
  %770 = vmatmul.mubr.bf16.gmra.mrb[0].mxu0 %v107
  %v771 = vpop.f32.mrb[0].mxu0
  %v772 = vadd.f32 %v220, %v771
  %v773 = vpop.f32.mrb[0].mxu0
  %v774 = vadd.f32 %v224, %v773
  %v775 = vpop.f32.mrb[0].mxu0
  %v776 = vadd.f32 %v220, %v775
  %v777 = vpop.f32.mrb[0].mxu0
  %v778 = vadd.f32 %v224, %v777
  %779 = vmatprep.mubr.bf16.mxu0 %v114
  %780 = vmatmul.mubr.bf16.gmra.mrb[0].mxu0 %v113
  %v781 = vpop.f32.mrb[0].mxu0
  %v782 = vadd.f32 %v220, %v781
  %v783 = vpop.f32.mrb[0].mxu0
  %v784 = vadd.f32 %v224, %v783
  %v785 = vpop.f32.mrb[0].mxu0
  %v786 = vadd.f32 %v220, %v785
  %v787 = vpop.f32.mrb[0].mxu0
  %v788 = vadd.f32 %v224, %v787
  %789 = vdwg.mxu0
  %790 = vmatprep.subr.bf16.mxu0 %v548
  %791 = vmatpush1.bf16.msra.mxu0 %v547
  %792 = vmatprep.subr.bf16.mxu0 %v550
  %793 = vmatpush1.bf16.msra.mxu0 %v549
  %794 = vmatprep.subr.bf16.mxu0 %v552
  %795 = vmatpush1.bf16.msra.mxu0 %v551
  %796 = vmatprep.subr.bf16.mxu0 %v554
  %797 = vmatpush1.bf16.msra.mxu0 %v553
  %798 = vmatprep.subr.bf16.mxu0 %v556
  %799 = vmatpush1.bf16.msra.mxu0 %v555
  %800 = vmatprep.subr.bf16.mxu0 %v558
  %801 = vmatpush1.bf16.msra.mxu0 %v557
  %802 = vmatprep.subr.bf16.mxu0 %v560
  %803 = vmatpush1.bf16.msra.mxu0 %v559
  %804 = vmatprep.subr.bf16.mxu0 %v562
  %805 = vmatpush1.bf16.msra.mxu0 %v561
  %806 = vmatprep.subr.bf16.mxu0 %v564
  %807 = vmatpush1.bf16.msra.mxu0 %v563
  %808 = vmatprep.subr.bf16.mxu0 %v566
  %809 = vmatpush1.bf16.msra.mxu0 %v565
  %810 = vmatprep.subr.bf16.mxu0 %v568
  %811 = vmatpush1.bf16.msra.mxu0 %v567
  %812 = vmatprep.subr.bf16.mxu0 %v570
  %813 = vmatpush1.bf16.msra.mxu0 %v569
  %814 = vmatprep.subr.bf16.mxu0 %v572
  %815 = vmatpush1.bf16.msra.mxu0 %v571
  %816 = vmatprep.subr.bf16.mxu0 %v574
  %817 = vmatpush1.bf16.msra.mxu0 %v573
  %818 = vmatprep.subr.bf16.mxu0 %v576
  %819 = vmatpush1.bf16.msra.mxu0 %v575
  %820 = vmatprep.subr.bf16.mxu0 %v578
  %821 = vmatpush1.bf16.msra.mxu0 %v577
  %822 = vmatprep.mubr.bf16.mxu0 %v92
  %823 = vmatmul.mubr.bf16.gmra.mrb[0].mxu0 %v91
  %v824 = vpop.f32.mrb[0].mxu0
  %v825 = vadd.f32 %v742, %v824
  %v826 = vpop.f32.mrb[0].mxu0
  %v827 = vadd.f32 %v744, %v826
  %v828 = vpop.f32.mrb[0].mxu0
  %v829 = vadd.f32 %v746, %v828
  %v830 = vpop.f32.mrb[0].mxu0
  %v831 = vadd.f32 %v748, %v830
  %832 = vmatprep.mubr.bf16.mxu0 %v98
  %833 = vmatmul.mubr.bf16.gmra.mrb[0].mxu0 %v97
  %v834 = vpop.f32.mrb[0].mxu0
  %v835 = vadd.f32 %v752, %v834
  %v836 = vpop.f32.mrb[0].mxu0
  %v837 = vadd.f32 %v754, %v836
  %v838 = vpop.f32.mrb[0].mxu0
  %v839 = vadd.f32 %v756, %v838
  %v840 = vpop.f32.mrb[0].mxu0
  %v841 = vadd.f32 %v758, %v840
  %842 = vmatprep.mubr.bf16.mxu0 %v104
  %843 = vmatmul.mubr.bf16.gmra.mrb[0].mxu0 %v103
  %v844 = vpop.f32.mrb[0].mxu0
  %v845 = vadd.f32 %v762, %v844
  %v846 = vpop.f32.mrb[0].mxu0
  %v847 = vadd.f32 %v764, %v846
  %v848 = vpop.f32.mrb[0].mxu0
  %v849 = vadd.f32 %v766, %v848
  %v850 = vpop.f32.mrb[0].mxu0
  %v851 = vadd.f32 %v768, %v850
  %852 = vmatprep.mubr.bf16.mxu0 %v110
  %853 = vmatmul.mubr.bf16.gmra.mrb[0].mxu0 %v109
  %v854 = vpop.f32.mrb[0].mxu0
  %v855 = vadd.f32 %v772, %v854
  %v856 = vpop.f32.mrb[0].mxu0
  %v857 = vadd.f32 %v774, %v856
  %v858 = vpop.f32.mrb[0].mxu0
  %v859 = vadd.f32 %v776, %v858
  %v860 = vpop.f32.mrb[0].mxu0
  %v861 = vadd.f32 %v778, %v860
  %862 = vmatprep.mubr.bf16.mxu0 %v116
  %863 = vmatmul.mubr.bf16.gmra.mrb[0].mxu0 %v115
  %v864 = vpop.f32.mrb[0].mxu0
  %v865 = vadd.f32 %v782, %v864
  %v866 = vpop.f32.mrb[0].mxu0
  %v867 = vadd.f32 %v784, %v866
  %v868 = vpop.f32.mrb[0].mxu0
  %v869 = vadd.f32 %v786, %v868
  %v870 = vpop.f32.mrb[0].mxu0
  %v871 = vadd.f32 %v788, %v870
  %872 = vdwg.mxu0
  %873 = vmatprep.subr.bf16.mxu0 %v580
  %874 = vmatpush1.bf16.msra.mxu0 %v579
  %875 = vmatprep.subr.bf16.mxu0 %v582
  %876 = vmatpush1.bf16.msra.mxu0 %v581
  %877 = vmatprep.subr.bf16.mxu0 %v584
  %878 = vmatpush1.bf16.msra.mxu0 %v583
  %879 = vmatprep.subr.bf16.mxu0 %v586
  %880 = vmatpush1.bf16.msra.mxu0 %v585
  %881 = vmatprep.subr.bf16.mxu0 %v588
  %882 = vmatpush1.bf16.msra.mxu0 %v587
  %883 = vmatprep.subr.bf16.mxu0 %v590
  %884 = vmatpush1.bf16.msra.mxu0 %v589
  %885 = vmatprep.subr.bf16.mxu0 %v592
  %886 = vmatpush1.bf16.msra.mxu0 %v591
  %887 = vmatprep.subr.bf16.mxu0 %v594
  %888 = vmatpush1.bf16.msra.mxu0 %v593
  %889 = vmatprep.subr.bf16.mxu0 %v596
  %890 = vmatpush1.bf16.msra.mxu0 %v595
  %891 = vmatprep.subr.bf16.mxu0 %v598
  %892 = vmatpush1.bf16.msra.mxu0 %v597
  %893 = vmatprep.subr.bf16.mxu0 %v600
  %894 = vmatpush1.bf16.msra.mxu0 %v599
  %895 = vmatprep.subr.bf16.mxu0 %v602
  %896 = vmatpush1.bf16.msra.mxu0 %v601
  %897 = vmatprep.subr.bf16.mxu0 %v604
  %898 = vmatpush1.bf16.msra.mxu0 %v603
  %899 = vmatprep.subr.bf16.mxu0 %v606
  %900 = vmatpush1.bf16.msra.mxu0 %v605
  %901 = vmatprep.subr.bf16.mxu0 %v608
  %902 = vmatpush1.bf16.msra.mxu0 %v607
  %903 = vmatprep.subr.bf16.mxu0 %v610
  %904 = vmatpush1.bf16.msra.mxu0 %v609
  %905 = vmatprep.mubr.bf16.mxu0 %v94
  %906 = vmatmul.mubr.bf16.gmra.mrb[0].mxu0 %v93
  %v907 = vpop.f32.mrb[0].mxu0
  %v908 = vadd.f32 %v825, %v907
  %v909 = vpop.f32.mrb[0].mxu0
  %v910 = vadd.f32 %v827, %v909
  %v911 = vpop.f32.mrb[0].mxu0
  %v912 = vadd.f32 %v829, %v911
  %v913 = vpop.f32.mrb[0].mxu0
  %v914 = vadd.f32 %v831, %v913
  %915 = vmatprep.mubr.bf16.mxu0 %v100
  %916 = vmatmul.mubr.bf16.gmra.mrb[0].mxu0 %v99
  %v917 = vpop.f32.mrb[0].mxu0
  %v918 = vadd.f32 %v835, %v917
  %v919 = vpop.f32.mrb[0].mxu0
  %v920 = vadd.f32 %v837, %v919
  %v921 = vpop.f32.mrb[0].mxu0
  %v922 = vadd.f32 %v839, %v921
  %v923 = vpop.f32.mrb[0].mxu0
  %v924 = vadd.f32 %v841, %v923
  %925 = vmatprep.mubr.bf16.mxu0 %v106
  %926 = vmatmul.mubr.bf16.gmra.mrb[0].mxu0 %v105
  %v927 = vpop.f32.mrb[0].mxu0
  %v928 = vadd.f32 %v845, %v927
  %v929 = vpop.f32.mrb[0].mxu0
  %v930 = vadd.f32 %v847, %v929
  %v931 = vpop.f32.mrb[0].mxu0
  %v932 = vadd.f32 %v849, %v931
  %v933 = vpop.f32.mrb[0].mxu0
  %v934 = vadd.f32 %v851, %v933
  %935 = vmatprep.mubr.bf16.mxu0 %v112
  %936 = vmatmul.mubr.bf16.gmra.mrb[0].mxu0 %v111
  %v937 = vpop.f32.mrb[0].mxu0
  %v938 = vadd.f32 %v855, %v937
  %v939 = vpop.f32.mrb[0].mxu0
  %v940 = vadd.f32 %v857, %v939
  %v941 = vpop.f32.mrb[0].mxu0
  %v942 = vadd.f32 %v859, %v941
  %v943 = vpop.f32.mrb[0].mxu0
  %v944 = vadd.f32 %v861, %v943
  %945 = vmatprep.mubr.bf16.mxu0 %v118
  %946 = vmatmul.mubr.bf16.gmra.mrb[0].mxu0 %v117
  %v947 = vpop.f32.mrb[0].mxu0
  %v948 = vadd.f32 %v865, %v947
  %v949 = vpop.f32.mrb[0].mxu0
  %v950 = vadd.f32 %v867, %v949
  %v951 = vpop.f32.mrb[0].mxu0
  %v952 = vadd.f32 %v869, %v951
  %v953 = vpop.f32.mrb[0].mxu0
  %v954 = vadd.f32 %v871, %v953
  %955 = vdwg.mxu0
  %v956 = vmax.f32 %v908, 0.0
  %v957 = vmax.f32 %v910, 0.0
  %v958 = vmax.f32 %v912, 0.0
  %v959 = vmax.f32 %v914, 0.0
  %v960 = vmax.f32 %v918, 0.0
  %v961 = vmax.f32 %v920, 0.0
  %v962 = vmax.f32 %v922, 0.0
  %v963 = vmax.f32 %v924, 0.0
  %v964 = vmax.f32 %v928, 0.0
  %v965 = vmax.f32 %v930, 0.0
  %v966 = vmax.f32 %v932, 0.0
  %v967 = vmax.f32 %v934, 0.0
  %v968 = vmax.f32 %v938, 0.0
  %v969 = vmax.f32 %v940, 0.0
  %v970 = vmax.f32 %v942, 0.0
  %v971 = vmax.f32 %v944, 0.0
  %v972 = vmax.f32 %v948, 0.0
  %v973 = vmax.f32 %v950, 0.0
  %v974 = vmax.f32 %v952, 0.0
  %v975 = vmax.f32 %v954, 0.0
  %v976 = vpack.c.bf16 %v958, %v956
  %v977 = vpack.c.bf16 %v959, %v957
  %v978 = vpack.c.bf16 %v962, %v960
  %v979 = vpack.c.bf16 %v963, %v961
  %v980 = vpack.c.bf16 %v966, %v964
  %v981 = vpack.c.bf16 %v967, %v965
  %v982 = vpack.c.bf16 %v970, %v968
  %v983 = vpack.c.bf16 %v971, %v969
  %v984 = vpack.c.bf16 %v974, %v972
  %v985 = vpack.c.bf16 %v975, %v973
  %v986 = vld [vmem:[%s3] sm:$0xf]
  %v987 = vld [vmem:[%s3 + $0x4] sm:$0xf]
  %v988 = vld [vmem:[%s3 + $0x8] sm:$0xf]
  %v989 = vld [vmem:[%s3 + $0xc] sm:$0xf]
  %v990 = vld [vmem:[%s3 + $0x10] sm:$0xf]
  %v991 = vld [vmem:[%s3 + $0x14] sm:$0xf]
  %v992 = vld [vmem:[%s3 + $0x18] sm:$0xf]
  %v993 = vld [vmem:[%s3 + $0x1c] sm:$0xf]
  %v994 = vld [vmem:[%s3 + $0x20] sm:$0xf]
  %v995 = vld [vmem:[%s3 + $0x24] sm:$0xf]
  %v996 = vld [vmem:[%s3 + $0x28] sm:$0xf]
  %v997 = vld [vmem:[%s3 + $0x2c] sm:$0xf]
  %v998 = vld [vmem:[%s3 + $0x30] sm:$0xf]
  %v999 = vld [vmem:[%s3 + $0x34] sm:$0xf]
  %v1000 = vld [vmem:[%s3 + $0x38] sm:$0xf]
  %v1001 = vld [vmem:[%s3 + $0x3c] sm:$0xf]
  %v1002 = vld [vmem:[%s3 + $0x40] sm:$0xf]
  %v1003 = vld [vmem:[%s3 + $0x44] sm:$0xf]
  %v1004 = vld [vmem:[%s3 + $0x48] sm:$0xf]
  %v1005 = vld [vmem:[%s3 + $0x4c] sm:$0xf]
  %v1006 = vld [vmem:[%s3 + $0x50] sm:$0xf]
  %v1007 = vld [vmem:[%s3 + $0x54] sm:$0xf]
  %v1008 = vld [vmem:[%s3 + $0x58] sm:$0xf]
  %v1009 = vld [vmem:[%s3 + $0x5c] sm:$0xf]
  %v1010 = vld [vmem:[%s3 + $0x60] sm:$0xf]
  %v1011 = vld [vmem:[%s3 + $0x64] sm:$0xf]
  %v1012 = vld [vmem:[%s3 + $0x68] sm:$0xf]
  %v1013 = vld [vmem:[%s3 + $0x6c] sm:$0xf]
  %v1014 = vld [vmem:[%s3 + $0x70] sm:$0xf]
  %v1015 = vld [vmem:[%s3 + $0x74] sm:$0xf]
  %v1016 = vld [vmem:[%s3 + $0x78] sm:$0xf]
  %v1017 = vld [vmem:[%s3 + $0x7c] sm:$0xf]
  %v1018 = vld [vmem:[%s4] sm:$0x1]
  %v1020 = vlaneseq
  %v1021 = vshrl.u32 %v1020, 7
  %v1022 = vsub.s32 0, %v1021
  %v1023 = vrot.slane %v1018, %v1022
  %v1057 = vunpack.c.l.b16 %v986
  %v1058 = vunpack.c.l.b16 %v987
  %v1059 = vunpack.c.l.b16 %v988
  %v1060 = vunpack.c.l.b16 %v989
  %v1061 = vunpack.c.l.b16 %v990
  %v1062 = vunpack.c.l.b16 %v991
  %v1063 = vunpack.c.l.b16 %v992
  %v1064 = vunpack.c.l.b16 %v993
  %v1065 = vunpack.c.l.b16 %v994
  %v1066 = vunpack.c.l.b16 %v995
  %v1067 = vunpack.c.l.b16 %v996
  %v1068 = vunpack.c.l.b16 %v997
  %v1069 = vunpack.c.l.b16 %v998
  %v1070 = vunpack.c.l.b16 %v999
  %v1071 = vunpack.c.l.b16 %v1000
  %v1072 = vunpack.c.l.b16 %v1001
  %v1073 = vunpack.c.l.b16 %v1002
  %v1074 = vunpack.c.l.b16 %v1003
  %v1075 = vunpack.c.l.b16 %v1004
  %v1076 = vunpack.c.l.b16 %v1005
  %v1077 = vunpack.c.l.b16 %v1006
  %v1078 = vunpack.c.l.b16 %v1007
  %v1079 = vunpack.c.l.b16 %v1008
  %v1080 = vunpack.c.l.b16 %v1009
  %v1081 = vunpack.c.l.b16 %v1010
  %v1082 = vunpack.c.l.b16 %v1011
  %v1083 = vunpack.c.l.b16 %v1012
  %v1084 = vunpack.c.l.b16 %v1013
  %v1085 = vunpack.c.l.b16 %v1014
  %v1086 = vunpack.c.l.b16 %v1015
  %v1087 = vunpack.c.l.b16 %v1016
  %v1088 = vunpack.c.l.b16 %v1017
  %v1089 = vpack.c.b16 %v1058, %v1057
  %v1090 = vpack.c.b16 %v1060, %v1059
  %v1091 = vpack.c.b16 %v1062, %v1061
  %v1092 = vpack.c.b16 %v1064, %v1063
  %v1093 = vpack.c.b16 %v1066, %v1065
  %v1094 = vpack.c.b16 %v1068, %v1067
  %v1095 = vpack.c.b16 %v1070, %v1069
  %v1096 = vpack.c.b16 %v1072, %v1071
  %v1097 = vpack.c.b16 %v1074, %v1073
  %v1098 = vpack.c.b16 %v1076, %v1075
  %v1099 = vpack.c.b16 %v1078, %v1077
  %v1100 = vpack.c.b16 %v1080, %v1079
  %v1101 = vpack.c.b16 %v1082, %v1081
  %v1102 = vpack.c.b16 %v1084, %v1083
  %v1103 = vpack.c.b16 %v1086, %v1085
  %v1104 = vpack.c.b16 %v1088, %v1087
  %1121 = vmatprep.subr.bf16.mxu0 0
  %1122 = vmatpush1.bf16.msra.mxu0 %v1089
  %1123 = vmatprep.subr.bf16.mxu0 0
  %1124 = vmatpush1.bf16.msra.mxu0 %v1090
  %1125 = vmatprep.subr.bf16.mxu0 0
  %1126 = vmatpush1.bf16.msra.mxu0 %v1091
  %1127 = vmatprep.subr.bf16.mxu0 0
  %1128 = vmatpush1.bf16.msra.mxu0 %v1092
  %1129 = vmatprep.subr.bf16.mxu0 0
  %1130 = vmatpush1.bf16.msra.mxu0 %v1093
  %1131 = vmatprep.subr.bf16.mxu0 0
  %1132 = vmatpush1.bf16.msra.mxu0 %v1094
  %1133 = vmatprep.subr.bf16.mxu0 0
  %1134 = vmatpush1.bf16.msra.mxu0 %v1095
  %1135 = vmatprep.subr.bf16.mxu0 0
  %1136 = vmatpush1.bf16.msra.mxu0 %v1096
  %1137 = vmatprep.subr.bf16.mxu0 0
  %1138 = vmatpush1.bf16.msra.mxu0 %v1097
  %1139 = vmatprep.subr.bf16.mxu0 0
  %1140 = vmatpush1.bf16.msra.mxu0 %v1098
  %1141 = vmatprep.subr.bf16.mxu0 0
  %1142 = vmatpush1.bf16.msra.mxu0 %v1099
  %1143 = vmatprep.subr.bf16.mxu0 0
  %1144 = vmatpush1.bf16.msra.mxu0 %v1100
  %1145 = vmatprep.subr.bf16.mxu0 0
  %1146 = vmatpush1.bf16.msra.mxu0 %v1101
  %1147 = vmatprep.subr.bf16.mxu0 0
  %1148 = vmatpush1.bf16.msra.mxu0 %v1102
  %1149 = vmatprep.subr.bf16.mxu0 0
  %1150 = vmatpush1.bf16.msra.mxu0 %v1103
  %1151 = vmatprep.subr.bf16.mxu0 0
  %1152 = vmatpush1.bf16.msra.mxu0 %v1104
  %1153 = vmatprep.mubr.bf16.mxu0 %v977
  %1154 = vmatmul.mubr.bf16.gmra.mrb[0].mxu0 %v976
  %v1155 = vpop.f32.mrb[0].mxu0
  %v1156 = vadd.f32 %v1023, %v1155
  %v1157 = vpop.f32.mrb[0].mxu0
  %v1158 = vpop.f32.mrb[0].mxu0
  %v1159 = vadd.f32 %v1023, %v1158
  %v1160 = vpop.f32.mrb[0].mxu0
  %1161 = vmatprep.mubr.bf16.mxu0 %v979
  %1162 = vmatmul.mubr.bf16.gmra.mrb[0].mxu0 %v978
  %v1163 = vpop.f32.mrb[0].mxu0
  %v1164 = vadd.f32 %v1023, %v1163
  %v1165 = vpop.f32.mrb[0].mxu0
  %v1166 = vpop.f32.mrb[0].mxu0
  %v1167 = vadd.f32 %v1023, %v1166
  %v1168 = vpop.f32.mrb[0].mxu0
  %1169 = vmatprep.mubr.bf16.mxu0 %v981
  %1170 = vmatmul.mubr.bf16.gmra.mrb[0].mxu0 %v980
  %v1171 = vpop.f32.mrb[0].mxu0
  %v1172 = vadd.f32 %v1023, %v1171
  %v1173 = vpop.f32.mrb[0].mxu0
  %v1174 = vpop.f32.mrb[0].mxu0
  %v1175 = vadd.f32 %v1023, %v1174
  %v1176 = vpop.f32.mrb[0].mxu0
  %1177 = vmatprep.mubr.bf16.mxu0 %v983
  %1178 = vmatmul.mubr.bf16.gmra.mrb[0].mxu0 %v982
  %v1179 = vpop.f32.mrb[0].mxu0
  %v1180 = vadd.f32 %v1023, %v1179
  %v1181 = vpop.f32.mrb[0].mxu0
  %v1182 = vpop.f32.mrb[0].mxu0
  %v1183 = vadd.f32 %v1023, %v1182
  %v1184 = vpop.f32.mrb[0].mxu0
  %1185 = vmatprep.mubr.bf16.mxu0 %v985
  %1186 = vmatmul.mubr.bf16.gmra.mrb[0].mxu0 %v984
  %v1187 = vpop.f32.mrb[0].mxu0
  %v1188 = vadd.f32 %v1023, %v1187
  %v1189 = vpop.f32.mrb[0].mxu0
  %v1190 = vpop.f32.mrb[0].mxu0
  %v1191 = vadd.f32 %v1023, %v1190
  %v1192 = vpop.f32.mrb[0].mxu0
  %1193 = vdwg.mxu0
  %v1194 = vmax.f32 %v1156, 0.0
  %v1195 = vmax.f32 %v1159, 0.0
  %v1196 = vmax.f32 %v1164, 0.0
  %v1197 = vmax.f32 %v1167, 0.0
  %v1198 = vmax.f32 %v1172, 0.0
  %v1199 = vmax.f32 %v1175, 0.0
  %v1200 = vmax.f32 %v1180, 0.0
  %v1201 = vmax.f32 %v1183, 0.0
  %v1202 = vmax.f32 %v1188, 0.0
  %v1203 = vmax.f32 %v1191, 0.0
  %v1204 = vld [vmem:[%s5] sm:$0x1]
  %v1205 = vld [vmem:[#allocation2] sm:$0x1]
  %1207 = vset.pattern.permute.xlu0 0
  %1208 = vperm.xlu0 %1207, %v1205
  %v1209 = vpop.permute.xlu0 %1208
  %v1211 = vlaneseq
  %v1212 = vshrl.u32 %v1211, 7
  %v1213 = vsub.s32 0, %v1212
  %v1214 = vrot.slane %v1209, %v1213
  %1215 = vmatprep.subr.mxu0 0.0
  %1216 = vmatpush1.xpose.msra.mxu0 %v1194
  %1217 = vmatprep.subr.mxu0 0.0
  %1218 = vmatpush1.xpose.msra.mxu0 %v1195
  %1219 = vmatprep.subr.mxu0 0.0
  %1220 = vmatpush1.xpose.msra.mxu0 %v1196
  %1221 = vmatprep.subr.mxu0 0.0
  %1222 = vmatpush1.xpose.msra.mxu0 %v1197
  %1223 = vmatprep.subr.mxu0 0.0
  %1224 = vmatpush1.xpose.msra.mxu0 %v1198
  %1225 = vmatprep.subr.mxu0 0.0
  %1226 = vmatpush1.xpose.msra.mxu0 %v1199
  %1227 = vmatprep.subr.mxu0 0.0
  %1228 = vmatpush1.xpose.msra.mxu0 %v1200
  %1229 = vmatprep.subr.mxu0 0.0
  %1230 = vmatpush1.xpose.msra.mxu0 %v1201
  %1231 = vmatprep.subr.mxu0 0.0
  %1232 = vmatpush1.xpose.msra.mxu0 %v1202
  %1233 = vmatprep.subr.mxu0 0.0
  %1234 = vmatpush1.xpose.msra.mxu0 %v1203
  %1235 = vmatprep.subr.mxu0 0.0
  %1236 = vmatpush1.xpose.msra.mxu0 0.0
  %1237 = vmatprep.subr.mxu0 0.0
  %1238 = vmatpush1.xpose.msra.mxu0 0.0
  %1239 = vmatprep.subr.mxu0 0.0
  %1240 = vmatpush1.xpose.msra.mxu0 0.0
  %1241 = vmatprep.subr.mxu0 0.0
  %1242 = vmatpush1.xpose.msra.mxu0 0.0
  %1243 = vmatprep.subr.mxu0 0.0
  %1244 = vmatpush1.xpose.msra.mxu0 0.0
  %1245 = vmatprep.subr.mxu0 0.0
  %1246 = vmatpush1.xpose.msra.mxu0 0.0
  %1247 = vmatprep.subr.mxu0 0.0
  %1248 = vmatpush1.xpose.msra.mxu0 0.0
  %1249 = vmatprep.subr.mxu0 0.0
  %1250 = vmatpush1.xpose.msra.mxu0 0.0
  %1251 = vmatprep.subr.mxu0 0.0
  %1252 = vmatpush1.xpose.msra.mxu0 0.0
  %1253 = vmatprep.subr.mxu0 0.0
  %1254 = vmatpush1.xpose.msra.mxu0 0.0
  %1255 = vmatprep.subr.mxu0 0.0
  %1256 = vmatpush1.xpose.msra.mxu0 0.0
  %1257 = vmatprep.subr.mxu0 0.0
  %1258 = vmatpush1.xpose.msra.mxu0 0.0
  %1259 = vmatprep.subr.mxu0 0.0
  %1260 = vmatpush1.xpose.msra.mxu0 0.0
  %1261 = vmatprep.subr.mxu0 0.0
  %1262 = vmatpush1.xpose.msra.mxu0 0.0
  %1263 = vmatprep.subr.mxu0 0.0
  %1264 = vmatpush1.xpose.msra.mxu0 0.0
  %1265 = vmatprep.subr.mxu0 0.0
  %1266 = vmatpush1.xpose.msra.mxu0 0.0
  %1267 = vmatprep.subr.mxu0 0.0
  %1268 = vmatpush1.xpose.msra.mxu0 0.0
  %1269 = vmatprep.subr.mxu0 0.0
  %1270 = vmatpush1.xpose.msra.mxu0 0.0
  %1271 = vmatprep.subr.mxu0 0.0
  %1272 = vmatpush1.xpose.msra.mxu0 0.0
  %1273 = vmatprep.subr.mxu0 0.0
  %1274 = vmatpush1.xpose.msra.mxu0 0.0
  %1275 = vmatprep.subr.mxu0 0.0
  %1276 = vmatpush1.xpose.msra.mxu0 0.0
  %1277 = vmatprep.subr.mxu0 0.0
  %1278 = vmatpush1.xpose.msra.mxu0 0.0
  %1279 = vmatprep.mubr.f32.mxu0 0.0
  %1280 = vmatmul.mubr.f32.gmra.mrb[0].mxu0 %v1204
  %v1281 = vpop.f32.mrb[0].mxu0
  %v1282 = vadd.f32 %v1214, %v1281
  %v1283 = vpop.f32.mrb[0].mxu0
  %1284 = vdwg.mxu0
  %v1285 = vtanh.pop %v1282
  %vm1286 = vcmask 647168
  %1287 = vst.msk [vmem:[%s7] sm:$0x1] %vm1286, %v1285
  // Predicated region
  $region30: #{chess_value_network.3} parent=0 // pred_check
    _
  $region31: #{chess_value_network.3} parent=0 // pred_check_branch
    %1289 = sbr.rel (0) target = $region33
  $region32: #{chess_value_network.3} parent=0 // pred_region
    _
  $region33: #{chess_value_network.3} parent=0 // pred_fallthru
    _
  // Predicated region
  $region34: #{chess_value_network.3} parent=0 // pred_check
    _
  $region35: #{chess_value_network.3} parent=0 // pred_check_branch
    %1291 = sbr.rel (0) target = $region37
  $region36: #{chess_value_network.3} parent=0 // pred_region
    _
  $region37: #{chess_value_network.3} parent=0 // pred_fallthru
    _

// kernel: chess_value_network.2
$region0: #{chess_value_network.2}
  #allocation0 [shape = 'u32[]', space=smem, size = 0x4, offset = 0x4, fixed_abs, tag = 'smem constant byte address 0x4 - core index']
  #allocation1 [shape = 'u32[144,128]{1,0:T(1,128)}', space=vmem, size = 0x12000, scoped, tag = 'internal scratch']
  #allocation2 [shape = 'f32[1,1]{1,0:T(1,128)S(1)}', space=vmem, size = 0x200, scoped, tag = 'scoped memory for chess_value_network.2']
  %s0 = inlined_call_operand.vmem [shape: f32[128,768], index: 0, kind: input, shape index: {}]
  %s1 = inlined_call_operand.vmem [shape: bf16[768,256], index: 1, kind: input, shape index: {}]
  %s2 = inlined_call_operand.vmem [shape: f32[1,256], index: 2, kind: input, shape index: {}]
  %s3 = inlined_call_operand.vmem [shape: bf16[256,128], index: 3, kind: input, shape index: {}]
  %s4 = inlined_call_operand.vmem [shape: f32[1,128], index: 4, kind: input, shape index: {}]
  %s5 = inlined_call_operand.vmem [shape: f32[1,128], index: 5, kind: input, shape index: {}]
  %s6 = inlined_call_operand.<no memory space> [shape: f32[1,1], index: 6, kind: input, shape index: {}]
  %s7 = inlined_call_operand.vmem [shape: f32[1,1,128], index: 7, kind: output, shape index: {}]
  %s8 = sld [smem:[#allocation0]]
  $region38: #{chess_value_network.2} parent=0
    _
  %s10 = ssub.s32 1, %s8
  %s11 = scalar_select 0, %s10, %s8
  %v12 = vstv %s6
  %13 = vst [vmem:[#allocation2] sm:$0x1] %v12
  // Predicated region
  $region2: #{chess_value_network.2} parent=0 // pred_check
    _
  $region3: #{chess_value_network.2} parent=0 // pred_check_branch
    %15 = sbr.rel (0) target = $region5
  $region4: #{chess_value_network.2} parent=0 // pred_region
    _
  $region5: #{chess_value_network.2} parent=0 // pred_fallthru
    _
  // Predicated region
  $region6: #{chess_value_network.2} parent=0 // pred_check
    _
  $region7: #{chess_value_network.2} parent=0 // pred_check_branch
    %17 = sbr.rel (0) target = $region9
  $region8: #{chess_value_network.2} parent=0 // pred_region
    _
  $region9: #{chess_value_network.2} parent=0 // pred_fallthru
    _
  // Predicated region
  $region10: #{chess_value_network.2} parent=0 // pred_check
    _
  $region11: #{chess_value_network.2} parent=0 // pred_check_branch
    %19 = sbr.rel (0) target = $region13
  $region12: #{chess_value_network.2} parent=0 // pred_region
    _
  $region13: #{chess_value_network.2} parent=0 // pred_fallthru
    _
  // Predicated region
  $region14: #{chess_value_network.2} parent=0 // pred_check
    _
  $region15: #{chess_value_network.2} parent=0 // pred_check_branch
    %21 = sbr.rel (0) target = $region17
  $region16: #{chess_value_network.2} parent=0 // pred_region
    _
  $region17: #{chess_value_network.2} parent=0 // pred_fallthru
    _
  // Predicated region
  $region18: #{chess_value_network.2} parent=0 // pred_check
    _
  $region19: #{chess_value_network.2} parent=0 // pred_check_branch
    %23 = sbr.rel (0) target = $region21
  $region20: #{chess_value_network.2} parent=0 // pred_region
    _
  $region21: #{chess_value_network.2} parent=0 // pred_fallthru
    _
  // Predicated region
  $region22: #{chess_value_network.2} parent=0 // pred_check
    _
  $region23: #{chess_value_network.2} parent=0 // pred_check_branch
    %25 = sbr.rel (0) target = $region25
  $region24: #{chess_value_network.2} parent=0 // pred_region
    _
  $region25: #{chess_value_network.2} parent=0 // pred_fallthru
    _
  // Predicated region
  $region26: #{chess_value_network.2} parent=0 // pred_check
    _
  $region27: #{chess_value_network.2} parent=0 // pred_check_branch
    %27 = sbr.rel (0) target = $region29
  $region28: #{chess_value_network.2} parent=0 // pred_region
    _
  $region29: #{chess_value_network.2} parent=0 // pred_fallthru
    _
  %v29 = vld [vmem:[%s0] sm:$0xff]
  %v30 = vld [vmem:[%s0 + $0x8] sm:$0xff]
  %v31 = vld [vmem:[%s0 + $0x10] sm:$0xff]
  %v32 = vld [vmem:[%s0 + $0x18] sm:$0xff]
  %v33 = vld [vmem:[%s0 + $0x20] sm:$0xff]
  %v34 = vld [vmem:[%s0 + $0x28] sm:$0xff]
  %v35 = vld [vmem:[%s0 + $0x30] sm:$0xff]
  %v36 = vld [vmem:[%s0 + $0x38] sm:$0xff]
  %v37 = vld [vmem:[%s0 + $0x40] sm:$0xff]
  %v38 = vld [vmem:[%s0 + $0x48] sm:$0xff]
  %v39 = vld [vmem:[%s0 + $0x50] sm:$0xff]
  %v40 = vld [vmem:[%s0 + $0x58] sm:$0xff]
  %v41 = vld [vmem:[%s0 + $0x60] sm:$0xff]
  %v42 = vld [vmem:[%s0 + $0x68] sm:$0xff]
  %v43 = vld [vmem:[%s0 + $0x70] sm:$0xff]
  %v44 = vld [vmem:[%s0 + $0x78] sm:$0xff]
  %v45 = vld [vmem:[%s0 + $0x80] sm:$0xff]
  %v46 = vld [vmem:[%s0 + $0x88] sm:$0xff]
  %v47 = vld [vmem:[%s0 + $0x90] sm:$0xff]
  %v48 = vld [vmem:[%s0 + $0x98] sm:$0xff]
  %v49 = vld [vmem:[%s0 + $0xa0] sm:$0xff]
  %v50 = vld [vmem:[%s0 + $0xa8] sm:$0xff]
  %v51 = vld [vmem:[%s0 + $0xb0] sm:$0xff]
  %v52 = vld [vmem:[%s0 + $0xb8] sm:$0xff]
  %v53 = vld [vmem:[%s0 + $0xc0] sm:$0xff]
  %v54 = vld [vmem:[%s0 + $0xc8] sm:$0xff]
  %v55 = vld [vmem:[%s0 + $0xd0] sm:$0xff]
  %v56 = vld [vmem:[%s0 + $0xd8] sm:$0xff]
  %v57 = vld [vmem:[%s0 + $0xe0] sm:$0xff]
  %v58 = vld [vmem:[%s0 + $0xe8] sm:$0xff]
  %v59 = vld [vmem:[%s0 + $0xf0] sm:$0xff]
  %v60 = vld [vmem:[%s0 + $0xf8] sm:$0xff]
  %v61 = vld [vmem:[%s0 + $0x100] sm:$0xff]
  %v62 = vld [vmem:[%s0 + $0x108] sm:$0xff]
  %v63 = vld [vmem:[%s0 + $0x110] sm:$0xff]
  %v64 = vld [vmem:[%s0 + $0x118] sm:$0xff]
  %v65 = vld [vmem:[%s0 + $0x120] sm:$0xff]
  %v66 = vld [vmem:[%s0 + $0x128] sm:$0xff]
  %v67 = vld [vmem:[%s0 + $0x130] sm:$0xff]
  %v68 = vld [vmem:[%s0 + $0x138] sm:$0xff]
  %v69 = vld [vmem:[%s0 + $0x140] sm:$0xff]
  %v70 = vld [vmem:[%s0 + $0x148] sm:$0xff]
  %v71 = vld [vmem:[%s0 + $0x150] sm:$0xff]
  %v72 = vld [vmem:[%s0 + $0x158] sm:$0xff]
  %v73 = vld [vmem:[%s0 + $0x160] sm:$0xff]
  %v74 = vld [vmem:[%s0 + $0x168] sm:$0xff]
  %v75 = vld [vmem:[%s0 + $0x170] sm:$0xff]
  %v76 = vld [vmem:[%s0 + $0x178] sm:$0xff]
  %v77 = vld [vmem:[%s0 + $0x180] sm:$0xff]
  %v78 = vld [vmem:[%s0 + $0x188] sm:$0xff]
  %v79 = vld [vmem:[%s0 + $0x190] sm:$0xff]
  %v80 = vld [vmem:[%s0 + $0x198] sm:$0xff]
  %v81 = vld [vmem:[%s0 + $0x1a0] sm:$0xff]
  %v82 = vld [vmem:[%s0 + $0x1a8] sm:$0xff]
  %v83 = vld [vmem:[%s0 + $0x1b0] sm:$0xff]
  %v84 = vld [vmem:[%s0 + $0x1b8] sm:$0xff]
  %v85 = vld [vmem:[%s0 + $0x1c0] sm:$0xff]
  %v86 = vld [vmem:[%s0 + $0x1c8] sm:$0xff]
  %v87 = vld [vmem:[%s0 + $0x1d0] sm:$0xff]
  %v88 = vld [vmem:[%s0 + $0x1d8] sm:$0xff]
  %v89 = vld [vmem:[%s0 + $0x1e0] sm:$0xff]
  %v90 = vld [vmem:[%s0 + $0x1e8] sm:$0xff]
  %v91 = vld [vmem:[%s0 + $0x1f0] sm:$0xff]
  %v92 = vld [vmem:[%s0 + $0x1f8] sm:$0xff]
  %v93 = vld [vmem:[%s0 + $0x200] sm:$0xff]
  %v94 = vld [vmem:[%s0 + $0x208] sm:$0xff]
  %v95 = vld [vmem:[%s0 + $0x210] sm:$0xff]
  %v96 = vld [vmem:[%s0 + $0x218] sm:$0xff]
  %v97 = vld [vmem:[%s0 + $0x220] sm:$0xff]
  %v98 = vld [vmem:[%s0 + $0x228] sm:$0xff]
  %v99 = vld [vmem:[%s0 + $0x230] sm:$0xff]
  %v100 = vld [vmem:[%s0 + $0x238] sm:$0xff]
  %v101 = vld [vmem:[%s0 + $0x240] sm:$0xff]
  %v102 = vld [vmem:[%s0 + $0x248] sm:$0xff]
  %v103 = vld [vmem:[%s0 + $0x250] sm:$0xff]
  %v104 = vld [vmem:[%s0 + $0x258] sm:$0xff]
  %v105 = vld [vmem:[%s0 + $0x260] sm:$0xff]
  %v106 = vld [vmem:[%s0 + $0x268] sm:$0xff]
  %v107 = vld [vmem:[%s0 + $0x270] sm:$0xff]
  %v108 = vld [vmem:[%s0 + $0x278] sm:$0xff]
  %v109 = vld [vmem:[%s0 + $0x280] sm:$0xff]
  %v110 = vld [vmem:[%s0 + $0x288] sm:$0xff]
  %v111 = vld [vmem:[%s0 + $0x290] sm:$0xff]
  %v112 = vld [vmem:[%s0 + $0x298] sm:$0xff]
  %v113 = vld [vmem:[%s0 + $0x2a0] sm:$0xff]
  %v114 = vld [vmem:[%s0 + $0x2a8] sm:$0xff]
  %v115 = vld [vmem:[%s0 + $0x2b0] sm:$0xff]
  %v116 = vld [vmem:[%s0 + $0x2b8] sm:$0xff]
  %v117 = vld [vmem:[%s0 + $0x2c0] sm:$0xff]
  %v118 = vld [vmem:[%s0 + $0x2c8] sm:$0xff]
  %v119 = vld [vmem:[%s0 + $0x2d0] sm:$0xff]
  %v120 = vld [vmem:[%s0 + $0x2d8] sm:$0xff]
  %v121 = vld [vmem:[%s0 + $0x2e0] sm:$0xff]
  %v122 = vld [vmem:[%s0 + $0x2e8] sm:$0xff]
  %v123 = vld [vmem:[%s0 + $0x2f0] sm:$0xff]
  %v124 = vld [vmem:[%s0 + $0x2f8] sm:$0xff]
  %v125 = vpack.c.bf16 %v35, %v29
  %v126 = vpack.c.bf16 %v36, %v30
  %v127 = vpack.c.bf16 %v37, %v31
  %v128 = vpack.c.bf16 %v38, %v32
  %v129 = vpack.c.bf16 %v39, %v33
  %v130 = vpack.c.bf16 %v40, %v34
  %v131 = vpack.c.bf16 %v47, %v41
  %v132 = vpack.c.bf16 %v48, %v42
  %v133 = vpack.c.bf16 %v49, %v43
  %v134 = vpack.c.bf16 %v50, %v44
  %v135 = vpack.c.bf16 %v51, %v45
  %v136 = vpack.c.bf16 %v52, %v46
  %v137 = vpack.c.bf16 %v59, %v53
  %v138 = vpack.c.bf16 %v60, %v54
  %v139 = vpack.c.bf16 %v61, %v55
  %v140 = vpack.c.bf16 %v62, %v56
  %v141 = vpack.c.bf16 %v63, %v57
  %v142 = vpack.c.bf16 %v64, %v58
  %v143 = vpack.c.bf16 %v71, %v65
  %v144 = vpack.c.bf16 %v72, %v66
  %v145 = vpack.c.bf16 %v73, %v67
  %v146 = vpack.c.bf16 %v74, %v68
  %v147 = vpack.c.bf16 %v75, %v69
  %v148 = vpack.c.bf16 %v76, %v70
  %v149 = vpack.c.bf16 %v83, %v77
  %v150 = vpack.c.bf16 %v84, %v78
  %v151 = vpack.c.bf16 %v85, %v79
  %v152 = vpack.c.bf16 %v86, %v80
  %v153 = vpack.c.bf16 %v87, %v81
  %v154 = vpack.c.bf16 %v88, %v82
  %v155 = vpack.c.bf16 %v95, %v89
  %v156 = vpack.c.bf16 %v96, %v90
  %v157 = vpack.c.bf16 %v97, %v91
  %v158 = vpack.c.bf16 %v98, %v92
  %v159 = vpack.c.bf16 %v99, %v93
  %v160 = vpack.c.bf16 %v100, %v94
  %v161 = vpack.c.bf16 %v107, %v101
  %v162 = vpack.c.bf16 %v108, %v102
  %v163 = vpack.c.bf16 %v109, %v103
  %v164 = vpack.c.bf16 %v110, %v104
  %v165 = vpack.c.bf16 %v111, %v105
  %v166 = vpack.c.bf16 %v112, %v106
  %v167 = vpack.c.bf16 %v119, %v113
  %v168 = vpack.c.bf16 %v120, %v114
  %v169 = vpack.c.bf16 %v121, %v115
  %v170 = vpack.c.bf16 %v122, %v116
  %v171 = vpack.c.bf16 %v123, %v117
  %v172 = vpack.c.bf16 %v124, %v118
  %v173 = vld [vmem:[%s1] sm:$0xff]
  %v174 = vld [vmem:[%s1 + $0x8] sm:$0xff]
  %v175 = vld [vmem:[%s1 + $0x10] sm:$0xff]
  %v176 = vld [vmem:[%s1 + $0x18] sm:$0xff]
  %v177 = vld [vmem:[%s1 + $0x20] sm:$0xff]
  %v178 = vld [vmem:[%s1 + $0x28] sm:$0xff]
  %v179 = vld [vmem:[%s1 + $0x30] sm:$0xff]
  %v180 = vld [vmem:[%s1 + $0x38] sm:$0xff]
  %v181 = vld [vmem:[%s1 + $0x40] sm:$0xff]
  %v182 = vld [vmem:[%s1 + $0x48] sm:$0xff]
  %v183 = vld [vmem:[%s1 + $0x50] sm:$0xff]
  %v184 = vld [vmem:[%s1 + $0x58] sm:$0xff]
  %v185 = vld [vmem:[%s1 + $0x60] sm:$0xff]
  %v186 = vld [vmem:[%s1 + $0x68] sm:$0xff]
  %v187 = vld [vmem:[%s1 + $0x70] sm:$0xff]
  %v188 = vld [vmem:[%s1 + $0x78] sm:$0xff]
  %v189 = vld [vmem:[%s1 + $0x80] sm:$0xff]
  %v190 = vld [vmem:[%s1 + $0x88] sm:$0xff]
  %v191 = vld [vmem:[%s1 + $0x90] sm:$0xff]
  %v192 = vld [vmem:[%s1 + $0x98] sm:$0xff]
  %v193 = vld [vmem:[%s1 + $0xa0] sm:$0xff]
  %v194 = vld [vmem:[%s1 + $0xa8] sm:$0xff]
  %v195 = vld [vmem:[%s1 + $0xb0] sm:$0xff]
  %v196 = vld [vmem:[%s1 + $0xb8] sm:$0xff]
  %v197 = vld [vmem:[%s1 + $0xc0] sm:$0xff]
  %v198 = vld [vmem:[%s1 + $0xc8] sm:$0xff]
  %v199 = vld [vmem:[%s1 + $0xd0] sm:$0xff]
  %v200 = vld [vmem:[%s1 + $0xd8] sm:$0xff]
  %v201 = vld [vmem:[%s1 + $0xe0] sm:$0xff]
  %v202 = vld [vmem:[%s1 + $0xe8] sm:$0xff]
  %v203 = vld [vmem:[%s1 + $0xf0] sm:$0xff]
  %v204 = vld [vmem:[%s1 + $0xf8] sm:$0xff]
  %v205 = vld [vmem:[%s1 + $0x100] sm:$0xff]
  %v206 = vld [vmem:[%s1 + $0x108] sm:$0xff]
  %v207 = vld [vmem:[%s1 + $0x110] sm:$0xff]
  %v208 = vld [vmem:[%s1 + $0x118] sm:$0xff]
  %v209 = vld [vmem:[%s1 + $0x120] sm:$0xff]
  %v210 = vld [vmem:[%s1 + $0x128] sm:$0xff]
  %v211 = vld [vmem:[%s1 + $0x130] sm:$0xff]
  %v212 = vld [vmem:[%s1 + $0x138] sm:$0xff]
  %v213 = vld [vmem:[%s1 + $0x140] sm:$0xff]
  %v214 = vld [vmem:[%s1 + $0x148] sm:$0xff]
  %v215 = vld [vmem:[%s1 + $0x150] sm:$0xff]
  %v216 = vld [vmem:[%s1 + $0x158] sm:$0xff]
  %v217 = vld [vmem:[%s1 + $0x160] sm:$0xff]
  %v218 = vld [vmem:[%s1 + $0x168] sm:$0xff]
  %v219 = vld [vmem:[%s1 + $0x170] sm:$0xff]
  %v220 = vld [vmem:[%s1 + $0x178] sm:$0xff]
  %v221 = vld [vmem:[%s1 + $0x180] sm:$0xff]
  %v222 = vld [vmem:[%s1 + $0x188] sm:$0xff]
  %v223 = vld [vmem:[%s1 + $0x190] sm:$0xff]
  %v224 = vld [vmem:[%s1 + $0x198] sm:$0xff]
  %v225 = vld [vmem:[%s1 + $0x1a0] sm:$0xff]
  %v226 = vld [vmem:[%s1 + $0x1a8] sm:$0xff]
  %v227 = vld [vmem:[%s1 + $0x1b0] sm:$0xff]
  %v228 = vld [vmem:[%s1 + $0x1b8] sm:$0xff]
  %v229 = vld [vmem:[%s1 + $0x1c0] sm:$0xff]
  %v230 = vld [vmem:[%s1 + $0x1c8] sm:$0xff]
  %v231 = vld [vmem:[%s1 + $0x1d0] sm:$0xff]
  %v232 = vld [vmem:[%s1 + $0x1d8] sm:$0xff]
  %v233 = vld [vmem:[%s1 + $0x1e0] sm:$0xff]
  %v234 = vld [vmem:[%s1 + $0x1e8] sm:$0xff]
  %v235 = vld [vmem:[%s1 + $0x1f0] sm:$0xff]
  %v236 = vld [vmem:[%s1 + $0x1f8] sm:$0xff]
  %v237 = vld [vmem:[%s1 + $0x200] sm:$0xff]
  %v238 = vld [vmem:[%s1 + $0x208] sm:$0xff]
  %v239 = vld [vmem:[%s1 + $0x210] sm:$0xff]
  %v240 = vld [vmem:[%s1 + $0x218] sm:$0xff]
  %v241 = vld [vmem:[%s1 + $0x220] sm:$0xff]
  %v242 = vld [vmem:[%s1 + $0x228] sm:$0xff]
  %v243 = vld [vmem:[%s1 + $0x230] sm:$0xff]
  %v244 = vld [vmem:[%s1 + $0x238] sm:$0xff]
  %v245 = vld [vmem:[%s1 + $0x240] sm:$0xff]
  %v246 = vld [vmem:[%s1 + $0x248] sm:$0xff]
  %v247 = vld [vmem:[%s1 + $0x250] sm:$0xff]
  %v248 = vld [vmem:[%s1 + $0x258] sm:$0xff]
  %v249 = vld [vmem:[%s1 + $0x260] sm:$0xff]
  %v250 = vld [vmem:[%s1 + $0x268] sm:$0xff]
  %v251 = vld [vmem:[%s1 + $0x270] sm:$0xff]
  %v252 = vld [vmem:[%s1 + $0x278] sm:$0xff]
  %v253 = vld [vmem:[%s1 + $0x280] sm:$0xff]
  %v254 = vld [vmem:[%s1 + $0x288] sm:$0xff]
  %v255 = vld [vmem:[%s1 + $0x290] sm:$0xff]
  %v256 = vld [vmem:[%s1 + $0x298] sm:$0xff]
  %v257 = vld [vmem:[%s1 + $0x2a0] sm:$0xff]
  %v258 = vld [vmem:[%s1 + $0x2a8] sm:$0xff]
  %v259 = vld [vmem:[%s1 + $0x2b0] sm:$0xff]
  %v260 = vld [vmem:[%s1 + $0x2b8] sm:$0xff]
  %v261 = vld [vmem:[%s1 + $0x2c0] sm:$0xff]
  %v262 = vld [vmem:[%s1 + $0x2c8] sm:$0xff]
  %v263 = vld [vmem:[%s1 + $0x2d0] sm:$0xff]
  %v264 = vld [vmem:[%s1 + $0x2d8] sm:$0xff]
  %v265 = vld [vmem:[%s1 + $0x2e0] sm:$0xff]
  %v266 = vld [vmem:[%s1 + $0x2e8] sm:$0xff]
  %v267 = vld [vmem:[%s1 + $0x2f0] sm:$0xff]
  %v268 = vld [vmem:[%s1 + $0x2f8] sm:$0xff]
  %v269 = vld [vmem:[%s2] sm:$0x3]
  %v271 = vlaneseq
  %v272 = vshrl.u32 %v271, 7
  %v273 = vsub.s32 0, %v272
  %v274 = vrot.slane %v269, %v273
  %v275 = vlaneseq
  %v276 = vshrl.u32 %v275, 7
  %v277 = vsub.s32 1, %v276
  %v278 = vrot.slane %v269, %v277
  %v377 = vunpack.c.l.b16 %v173
  %v378 = vunpack.c.h.b16 %v173
  %v379 = vunpack.c.l.b16 %v174
  %v380 = vunpack.c.h.b16 %v174
  %v381 = vunpack.c.l.b16 %v175
  %v382 = vunpack.c.h.b16 %v175
  %v383 = vunpack.c.l.b16 %v176
  %v384 = vunpack.c.h.b16 %v176
  %v385 = vunpack.c.l.b16 %v177
  %v386 = vunpack.c.h.b16 %v177
  %v387 = vunpack.c.l.b16 %v178
  %v388 = vunpack.c.h.b16 %v178
  %v389 = vunpack.c.l.b16 %v179
  %v390 = vunpack.c.h.b16 %v179
  %v391 = vunpack.c.l.b16 %v180
  %v392 = vunpack.c.h.b16 %v180
  %v393 = vunpack.c.l.b16 %v181
  %v394 = vunpack.c.h.b16 %v181
  %v395 = vunpack.c.l.b16 %v182
  %v396 = vunpack.c.h.b16 %v182
  %v397 = vunpack.c.l.b16 %v183
  %v398 = vunpack.c.h.b16 %v183
  %v399 = vunpack.c.l.b16 %v184
  %v400 = vunpack.c.h.b16 %v184
  %v401 = vunpack.c.l.b16 %v185
  %v402 = vunpack.c.h.b16 %v185
  %v403 = vunpack.c.l.b16 %v186
  %v404 = vunpack.c.h.b16 %v186
  %v405 = vunpack.c.l.b16 %v187
  %v406 = vunpack.c.h.b16 %v187
  %v407 = vunpack.c.l.b16 %v188
  %v408 = vunpack.c.h.b16 %v188
  %v409 = vunpack.c.l.b16 %v189
  %v410 = vunpack.c.h.b16 %v189
  %v411 = vunpack.c.l.b16 %v190
  %v412 = vunpack.c.h.b16 %v190
  %v413 = vunpack.c.l.b16 %v191
  %v414 = vunpack.c.h.b16 %v191
  %v415 = vunpack.c.l.b16 %v192
  %v416 = vunpack.c.h.b16 %v192
  %v417 = vunpack.c.l.b16 %v193
  %v418 = vunpack.c.h.b16 %v193
  %v419 = vunpack.c.l.b16 %v194
  %v420 = vunpack.c.h.b16 %v194
  %v421 = vunpack.c.l.b16 %v195
  %v422 = vunpack.c.h.b16 %v195
  %v423 = vunpack.c.l.b16 %v196
  %v424 = vunpack.c.h.b16 %v196
  %v425 = vunpack.c.l.b16 %v197
  %v426 = vunpack.c.h.b16 %v197
  %v427 = vunpack.c.l.b16 %v198
  %v428 = vunpack.c.h.b16 %v198
  %v429 = vunpack.c.l.b16 %v199
  %v430 = vunpack.c.h.b16 %v199
  %v431 = vunpack.c.l.b16 %v200
  %v432 = vunpack.c.h.b16 %v200
  %v433 = vunpack.c.l.b16 %v201
  %v434 = vunpack.c.h.b16 %v201
  %v435 = vunpack.c.l.b16 %v202
  %v436 = vunpack.c.h.b16 %v202
  %v437 = vunpack.c.l.b16 %v203
  %v438 = vunpack.c.h.b16 %v203
  %v439 = vunpack.c.l.b16 %v204
  %v440 = vunpack.c.h.b16 %v204
  %v441 = vunpack.c.l.b16 %v205
  %v442 = vunpack.c.h.b16 %v205
  %v443 = vunpack.c.l.b16 %v206
  %v444 = vunpack.c.h.b16 %v206
  %v445 = vunpack.c.l.b16 %v207
  %v446 = vunpack.c.h.b16 %v207
  %v447 = vunpack.c.l.b16 %v208
  %v448 = vunpack.c.h.b16 %v208
  %v449 = vunpack.c.l.b16 %v209
  %v450 = vunpack.c.h.b16 %v209
  %v451 = vunpack.c.l.b16 %v210
  %v452 = vunpack.c.h.b16 %v210
  %v453 = vunpack.c.l.b16 %v211
  %v454 = vunpack.c.h.b16 %v211
  %v455 = vunpack.c.l.b16 %v212
  %v456 = vunpack.c.h.b16 %v212
  %v457 = vunpack.c.l.b16 %v213
  %v458 = vunpack.c.h.b16 %v213
  %v459 = vunpack.c.l.b16 %v214
  %v460 = vunpack.c.h.b16 %v214
  %v461 = vunpack.c.l.b16 %v215
  %v462 = vunpack.c.h.b16 %v215
  %v463 = vunpack.c.l.b16 %v216
  %v464 = vunpack.c.h.b16 %v216
  %v465 = vunpack.c.l.b16 %v217
  %v466 = vunpack.c.h.b16 %v217
  %v467 = vunpack.c.l.b16 %v218
  %v468 = vunpack.c.h.b16 %v218
  %v469 = vunpack.c.l.b16 %v219
  %v470 = vunpack.c.h.b16 %v219
  %v471 = vunpack.c.l.b16 %v220
  %v472 = vunpack.c.h.b16 %v220
  %v473 = vunpack.c.l.b16 %v221
  %v474 = vunpack.c.h.b16 %v221
  %v475 = vunpack.c.l.b16 %v222
  %v476 = vunpack.c.h.b16 %v222
  %v477 = vunpack.c.l.b16 %v223
  %v478 = vunpack.c.h.b16 %v223
  %v479 = vunpack.c.l.b16 %v224
  %v480 = vunpack.c.h.b16 %v224
  %v481 = vunpack.c.l.b16 %v225
  %v482 = vunpack.c.h.b16 %v225
  %v483 = vunpack.c.l.b16 %v226
  %v484 = vunpack.c.h.b16 %v226
  %v485 = vunpack.c.l.b16 %v227
  %v486 = vunpack.c.h.b16 %v227
  %v487 = vunpack.c.l.b16 %v228
  %v488 = vunpack.c.h.b16 %v228
  %v489 = vunpack.c.l.b16 %v229
  %v490 = vunpack.c.h.b16 %v229
  %v491 = vunpack.c.l.b16 %v230
  %v492 = vunpack.c.h.b16 %v230
  %v493 = vunpack.c.l.b16 %v231
  %v494 = vunpack.c.h.b16 %v231
  %v495 = vunpack.c.l.b16 %v232
  %v496 = vunpack.c.h.b16 %v232
  %v497 = vunpack.c.l.b16 %v233
  %v498 = vunpack.c.h.b16 %v233
  %v499 = vunpack.c.l.b16 %v234
  %v500 = vunpack.c.h.b16 %v234
  %v501 = vunpack.c.l.b16 %v235
  %v502 = vunpack.c.h.b16 %v235
  %v503 = vunpack.c.l.b16 %v236
  %v504 = vunpack.c.h.b16 %v236
  %v505 = vunpack.c.l.b16 %v237
  %v506 = vunpack.c.h.b16 %v237
  %v507 = vunpack.c.l.b16 %v238
  %v508 = vunpack.c.h.b16 %v238
  %v509 = vunpack.c.l.b16 %v239
  %v510 = vunpack.c.h.b16 %v239
  %v511 = vunpack.c.l.b16 %v240
  %v512 = vunpack.c.h.b16 %v240
  %v513 = vunpack.c.l.b16 %v241
  %v514 = vunpack.c.h.b16 %v241
  %v515 = vunpack.c.l.b16 %v242
  %v516 = vunpack.c.h.b16 %v242
  %v517 = vunpack.c.l.b16 %v243
  %v518 = vunpack.c.h.b16 %v243
  %v519 = vunpack.c.l.b16 %v244
  %v520 = vunpack.c.h.b16 %v244
  %v521 = vunpack.c.l.b16 %v245
  %v522 = vunpack.c.h.b16 %v245
  %v523 = vunpack.c.l.b16 %v246
  %v524 = vunpack.c.h.b16 %v246
  %v525 = vunpack.c.l.b16 %v247
  %v526 = vunpack.c.h.b16 %v247
  %v527 = vunpack.c.l.b16 %v248
  %v528 = vunpack.c.h.b16 %v248
  %v529 = vunpack.c.l.b16 %v249
  %v530 = vunpack.c.h.b16 %v249
  %v531 = vunpack.c.l.b16 %v250
  %v532 = vunpack.c.h.b16 %v250
  %v533 = vunpack.c.l.b16 %v251
  %v534 = vunpack.c.h.b16 %v251
  %v535 = vunpack.c.l.b16 %v252
  %v536 = vunpack.c.h.b16 %v252
  %v537 = vunpack.c.l.b16 %v253
  %v538 = vunpack.c.h.b16 %v253
  %v539 = vunpack.c.l.b16 %v254
  %v540 = vunpack.c.h.b16 %v254
  %v541 = vunpack.c.l.b16 %v255
  %v542 = vunpack.c.h.b16 %v255
  %v543 = vunpack.c.l.b16 %v256
  %v544 = vunpack.c.h.b16 %v256
  %v545 = vunpack.c.l.b16 %v257
  %v546 = vunpack.c.h.b16 %v257
  %v547 = vunpack.c.l.b16 %v258
  %v548 = vunpack.c.h.b16 %v258
  %v549 = vunpack.c.l.b16 %v259
  %v550 = vunpack.c.h.b16 %v259
  %v551 = vunpack.c.l.b16 %v260
  %v552 = vunpack.c.h.b16 %v260
  %v553 = vunpack.c.l.b16 %v261
  %v554 = vunpack.c.h.b16 %v261
  %v555 = vunpack.c.l.b16 %v262
  %v556 = vunpack.c.h.b16 %v262
  %v557 = vunpack.c.l.b16 %v263
  %v558 = vunpack.c.h.b16 %v263
  %v559 = vunpack.c.l.b16 %v264
  %v560 = vunpack.c.h.b16 %v264
  %v561 = vunpack.c.l.b16 %v265
  %v562 = vunpack.c.h.b16 %v265
  %v563 = vunpack.c.l.b16 %v266
  %v564 = vunpack.c.h.b16 %v266
  %v565 = vunpack.c.l.b16 %v267
  %v566 = vunpack.c.h.b16 %v267
  %v567 = vunpack.c.l.b16 %v268
  %v568 = vunpack.c.h.b16 %v268
  %v569 = vpack.c.b16 %v379, %v377
  %v570 = vpack.c.b16 %v380, %v378
  %v571 = vpack.c.b16 %v383, %v381
  %v572 = vpack.c.b16 %v384, %v382
  %v573 = vpack.c.b16 %v387, %v385
  %v574 = vpack.c.b16 %v388, %v386
  %v575 = vpack.c.b16 %v391, %v389
  %v576 = vpack.c.b16 %v392, %v390
  %v577 = vpack.c.b16 %v395, %v393
  %v578 = vpack.c.b16 %v396, %v394
  %v579 = vpack.c.b16 %v399, %v397
  %v580 = vpack.c.b16 %v400, %v398
  %v581 = vpack.c.b16 %v403, %v401
  %v582 = vpack.c.b16 %v404, %v402
  %v583 = vpack.c.b16 %v407, %v405
  %v584 = vpack.c.b16 %v408, %v406
  %v585 = vpack.c.b16 %v411, %v409
  %v586 = vpack.c.b16 %v412, %v410
  %v587 = vpack.c.b16 %v415, %v413
  %v588 = vpack.c.b16 %v416, %v414
  %v589 = vpack.c.b16 %v419, %v417
  %v590 = vpack.c.b16 %v420, %v418
  %v591 = vpack.c.b16 %v423, %v421
  %v592 = vpack.c.b16 %v424, %v422
  %v593 = vpack.c.b16 %v427, %v425
  %v594 = vpack.c.b16 %v428, %v426
  %v595 = vpack.c.b16 %v431, %v429
  %v596 = vpack.c.b16 %v432, %v430
  %v597 = vpack.c.b16 %v435, %v433
  %v598 = vpack.c.b16 %v436, %v434
  %v599 = vpack.c.b16 %v439, %v437
  %v600 = vpack.c.b16 %v440, %v438
  %v601 = vpack.c.b16 %v443, %v441
  %v602 = vpack.c.b16 %v444, %v442
  %v603 = vpack.c.b16 %v447, %v445
  %v604 = vpack.c.b16 %v448, %v446
  %v605 = vpack.c.b16 %v451, %v449
  %v606 = vpack.c.b16 %v452, %v450
  %v607 = vpack.c.b16 %v455, %v453
  %v608 = vpack.c.b16 %v456, %v454
  %v609 = vpack.c.b16 %v459, %v457
  %v610 = vpack.c.b16 %v460, %v458
  %v611 = vpack.c.b16 %v463, %v461
  %v612 = vpack.c.b16 %v464, %v462
  %v613 = vpack.c.b16 %v467, %v465
  %v614 = vpack.c.b16 %v468, %v466
  %v615 = vpack.c.b16 %v471, %v469
  %v616 = vpack.c.b16 %v472, %v470
  %v617 = vpack.c.b16 %v475, %v473
  %v618 = vpack.c.b16 %v476, %v474
  %v619 = vpack.c.b16 %v479, %v477
  %v620 = vpack.c.b16 %v480, %v478
  %v621 = vpack.c.b16 %v483, %v481
  %v622 = vpack.c.b16 %v484, %v482
  %v623 = vpack.c.b16 %v487, %v485
  %v624 = vpack.c.b16 %v488, %v486
  %v625 = vpack.c.b16 %v491, %v489
  %v626 = vpack.c.b16 %v492, %v490
  %v627 = vpack.c.b16 %v495, %v493
  %v628 = vpack.c.b16 %v496, %v494
  %v629 = vpack.c.b16 %v499, %v497
  %v630 = vpack.c.b16 %v500, %v498
  %v631 = vpack.c.b16 %v503, %v501
  %v632 = vpack.c.b16 %v504, %v502
  %v633 = vpack.c.b16 %v507, %v505
  %v634 = vpack.c.b16 %v508, %v506
  %v635 = vpack.c.b16 %v511, %v509
  %v636 = vpack.c.b16 %v512, %v510
  %v637 = vpack.c.b16 %v515, %v513
  %v638 = vpack.c.b16 %v516, %v514
  %v639 = vpack.c.b16 %v519, %v517
  %v640 = vpack.c.b16 %v520, %v518
  %v641 = vpack.c.b16 %v523, %v521
  %v642 = vpack.c.b16 %v524, %v522
  %v643 = vpack.c.b16 %v527, %v525
  %v644 = vpack.c.b16 %v528, %v526
  %v645 = vpack.c.b16 %v531, %v529
  %v646 = vpack.c.b16 %v532, %v530
  %v647 = vpack.c.b16 %v535, %v533
  %v648 = vpack.c.b16 %v536, %v534
  %v649 = vpack.c.b16 %v539, %v537
  %v650 = vpack.c.b16 %v540, %v538
  %v651 = vpack.c.b16 %v543, %v541
  %v652 = vpack.c.b16 %v544, %v542
  %v653 = vpack.c.b16 %v547, %v545
  %v654 = vpack.c.b16 %v548, %v546
  %v655 = vpack.c.b16 %v551, %v549
  %v656 = vpack.c.b16 %v552, %v550
  %v657 = vpack.c.b16 %v555, %v553
  %v658 = vpack.c.b16 %v556, %v554
  %v659 = vpack.c.b16 %v559, %v557
  %v660 = vpack.c.b16 %v560, %v558
  %v661 = vpack.c.b16 %v563, %v561
  %v662 = vpack.c.b16 %v564, %v562
  %v663 = vpack.c.b16 %v567, %v565
  %v664 = vpack.c.b16 %v568, %v566
  %761 = vmatprep.subr.bf16.mxu0 %v570
  %762 = vmatpush1.bf16.msra.mxu0 %v569
  %763 = vmatprep.subr.bf16.mxu0 %v572
  %764 = vmatpush1.bf16.msra.mxu0 %v571
  %765 = vmatprep.subr.bf16.mxu0 %v574
  %766 = vmatpush1.bf16.msra.mxu0 %v573
  %767 = vmatprep.subr.bf16.mxu0 %v576
  %768 = vmatpush1.bf16.msra.mxu0 %v575
  %769 = vmatprep.subr.bf16.mxu0 %v578
  %770 = vmatpush1.bf16.msra.mxu0 %v577
  %771 = vmatprep.subr.bf16.mxu0 %v580
  %772 = vmatpush1.bf16.msra.mxu0 %v579
  %773 = vmatprep.subr.bf16.mxu0 %v582
  %774 = vmatpush1.bf16.msra.mxu0 %v581
  %775 = vmatprep.subr.bf16.mxu0 %v584
  %776 = vmatpush1.bf16.msra.mxu0 %v583
  %777 = vmatprep.subr.bf16.mxu0 %v586
  %778 = vmatpush1.bf16.msra.mxu0 %v585
  %779 = vmatprep.subr.bf16.mxu0 %v588
  %780 = vmatpush1.bf16.msra.mxu0 %v587
  %781 = vmatprep.subr.bf16.mxu0 %v590
  %782 = vmatpush1.bf16.msra.mxu0 %v589
  %783 = vmatprep.subr.bf16.mxu0 %v592
  %784 = vmatpush1.bf16.msra.mxu0 %v591
  %785 = vmatprep.subr.bf16.mxu0 %v594
  %786 = vmatpush1.bf16.msra.mxu0 %v593
  %787 = vmatprep.subr.bf16.mxu0 %v596
  %788 = vmatpush1.bf16.msra.mxu0 %v595
  %789 = vmatprep.subr.bf16.mxu0 %v598
  %790 = vmatpush1.bf16.msra.mxu0 %v597
  %791 = vmatprep.subr.bf16.mxu0 %v600
  %792 = vmatpush1.bf16.msra.mxu0 %v599
  %793 = vmatprep.mubr.bf16.mxu0 %v126
  %794 = vmatmul.mubr.bf16.gmra.mrb[0].mxu0 %v125
  %v795 = vpop.f32.mrb[0].mxu0
  %v796 = vadd.f32 %v274, %v795
  %v797 = vpop.f32.mrb[0].mxu0
  %v798 = vadd.f32 %v278, %v797
  %v799 = vpop.f32.mrb[0].mxu0
  %v800 = vadd.f32 %v274, %v799
  %v801 = vpop.f32.mrb[0].mxu0
  %v802 = vadd.f32 %v278, %v801
  %803 = vmatprep.mubr.bf16.mxu0 %v132
  %804 = vmatmul.mubr.bf16.gmra.mrb[0].mxu0 %v131
  %v805 = vpop.f32.mrb[0].mxu0
  %v806 = vadd.f32 %v274, %v805
  %v807 = vpop.f32.mrb[0].mxu0
  %v808 = vadd.f32 %v278, %v807
  %v809 = vpop.f32.mrb[0].mxu0
  %v810 = vadd.f32 %v274, %v809
  %v811 = vpop.f32.mrb[0].mxu0
  %v812 = vadd.f32 %v278, %v811
  %813 = vmatprep.mubr.bf16.mxu0 %v138
  %814 = vmatmul.mubr.bf16.gmra.mrb[0].mxu0 %v137
  %v815 = vpop.f32.mrb[0].mxu0
  %v816 = vadd.f32 %v274, %v815
  %v817 = vpop.f32.mrb[0].mxu0
  %v818 = vadd.f32 %v278, %v817
  %v819 = vpop.f32.mrb[0].mxu0
  %v820 = vadd.f32 %v274, %v819
  %v821 = vpop.f32.mrb[0].mxu0
  %v822 = vadd.f32 %v278, %v821
  %823 = vmatprep.mubr.bf16.mxu0 %v144
  %824 = vmatmul.mubr.bf16.gmra.mrb[0].mxu0 %v143
  %v825 = vpop.f32.mrb[0].mxu0
  %v826 = vadd.f32 %v274, %v825
  %v827 = vpop.f32.mrb[0].mxu0
  %v828 = vadd.f32 %v278, %v827
  %v829 = vpop.f32.mrb[0].mxu0
  %v830 = vadd.f32 %v274, %v829
  %v831 = vpop.f32.mrb[0].mxu0
  %v832 = vadd.f32 %v278, %v831
  %833 = vmatprep.mubr.bf16.mxu0 %v150
  %834 = vmatmul.mubr.bf16.gmra.mrb[0].mxu0 %v149
  %v835 = vpop.f32.mrb[0].mxu0
  %v836 = vadd.f32 %v274, %v835
  %v837 = vpop.f32.mrb[0].mxu0
  %v838 = vadd.f32 %v278, %v837
  %v839 = vpop.f32.mrb[0].mxu0
  %v840 = vadd.f32 %v274, %v839
  %v841 = vpop.f32.mrb[0].mxu0
  %v842 = vadd.f32 %v278, %v841
  %843 = vmatprep.mubr.bf16.mxu0 %v156
  %844 = vmatmul.mubr.bf16.gmra.mrb[0].mxu0 %v155
  %v845 = vpop.f32.mrb[0].mxu0
  %v846 = vadd.f32 %v274, %v845
  %v847 = vpop.f32.mrb[0].mxu0
  %v848 = vadd.f32 %v278, %v847
  %v849 = vpop.f32.mrb[0].mxu0
  %v850 = vadd.f32 %v274, %v849
  %v851 = vpop.f32.mrb[0].mxu0
  %v852 = vadd.f32 %v278, %v851
  %853 = vmatprep.mubr.bf16.mxu0 %v162
  %854 = vmatmul.mubr.bf16.gmra.mrb[0].mxu0 %v161
  %v855 = vpop.f32.mrb[0].mxu0
  %v856 = vadd.f32 %v274, %v855
  %v857 = vpop.f32.mrb[0].mxu0
  %v858 = vadd.f32 %v278, %v857
  %v859 = vpop.f32.mrb[0].mxu0
  %v860 = vadd.f32 %v274, %v859
  %v861 = vpop.f32.mrb[0].mxu0
  %v862 = vadd.f32 %v278, %v861
  %863 = vmatprep.mubr.bf16.mxu0 %v168
  %864 = vmatmul.mubr.bf16.gmra.mrb[0].mxu0 %v167
  %v865 = vpop.f32.mrb[0].mxu0
  %v866 = vadd.f32 %v274, %v865
  %v867 = vpop.f32.mrb[0].mxu0
  %v868 = vadd.f32 %v278, %v867
  %v869 = vpop.f32.mrb[0].mxu0
  %v870 = vadd.f32 %v274, %v869
  %v871 = vpop.f32.mrb[0].mxu0
  %v872 = vadd.f32 %v278, %v871
  %873 = vdwg.mxu0
  %874 = vmatprep.subr.bf16.mxu0 %v602
  %875 = vmatpush1.bf16.msra.mxu0 %v601
  %876 = vmatprep.subr.bf16.mxu0 %v604
  %877 = vmatpush1.bf16.msra.mxu0 %v603
  %878 = vmatprep.subr.bf16.mxu0 %v606
  %879 = vmatpush1.bf16.msra.mxu0 %v605
  %880 = vmatprep.subr.bf16.mxu0 %v608
  %881 = vmatpush1.bf16.msra.mxu0 %v607
  %882 = vmatprep.subr.bf16.mxu0 %v610
  %883 = vmatpush1.bf16.msra.mxu0 %v609
  %884 = vmatprep.subr.bf16.mxu0 %v612
  %885 = vmatpush1.bf16.msra.mxu0 %v611
  %886 = vmatprep.subr.bf16.mxu0 %v614
  %887 = vmatpush1.bf16.msra.mxu0 %v613
  %888 = vmatprep.subr.bf16.mxu0 %v616
  %889 = vmatpush1.bf16.msra.mxu0 %v615
  %890 = vmatprep.subr.bf16.mxu0 %v618
  %891 = vmatpush1.bf16.msra.mxu0 %v617
  %892 = vmatprep.subr.bf16.mxu0 %v620
  %893 = vmatpush1.bf16.msra.mxu0 %v619
  %894 = vmatprep.subr.bf16.mxu0 %v622
  %895 = vmatpush1.bf16.msra.mxu0 %v621
  %896 = vmatprep.subr.bf16.mxu0 %v624
  %897 = vmatpush1.bf16.msra.mxu0 %v623
  %898 = vmatprep.subr.bf16.mxu0 %v626
  %899 = vmatpush1.bf16.msra.mxu0 %v625
  %900 = vmatprep.subr.bf16.mxu0 %v628
  %901 = vmatpush1.bf16.msra.mxu0 %v627
  %902 = vmatprep.subr.bf16.mxu0 %v630
  %903 = vmatpush1.bf16.msra.mxu0 %v629
  %904 = vmatprep.subr.bf16.mxu0 %v632
  %905 = vmatpush1.bf16.msra.mxu0 %v631
  %906 = vmatprep.mubr.bf16.mxu0 %v128
  %907 = vmatmul.mubr.bf16.gmra.mrb[0].mxu0 %v127
  %v908 = vpop.f32.mrb[0].mxu0
  %v909 = vadd.f32 %v796, %v908
  %v910 = vpop.f32.mrb[0].mxu0
  %v911 = vadd.f32 %v798, %v910
  %v912 = vpop.f32.mrb[0].mxu0
  %v913 = vadd.f32 %v800, %v912
  %v914 = vpop.f32.mrb[0].mxu0
  %v915 = vadd.f32 %v802, %v914
  %916 = vmatprep.mubr.bf16.mxu0 %v134
  %917 = vmatmul.mubr.bf16.gmra.mrb[0].mxu0 %v133
  %v918 = vpop.f32.mrb[0].mxu0
  %v919 = vadd.f32 %v806, %v918
  %v920 = vpop.f32.mrb[0].mxu0
  %v921 = vadd.f32 %v808, %v920
  %v922 = vpop.f32.mrb[0].mxu0
  %v923 = vadd.f32 %v810, %v922
  %v924 = vpop.f32.mrb[0].mxu0
  %v925 = vadd.f32 %v812, %v924
  %926 = vmatprep.mubr.bf16.mxu0 %v140
  %927 = vmatmul.mubr.bf16.gmra.mrb[0].mxu0 %v139
  %v928 = vpop.f32.mrb[0].mxu0
  %v929 = vadd.f32 %v816, %v928
  %v930 = vpop.f32.mrb[0].mxu0
  %v931 = vadd.f32 %v818, %v930
  %v932 = vpop.f32.mrb[0].mxu0
  %v933 = vadd.f32 %v820, %v932
  %v934 = vpop.f32.mrb[0].mxu0
  %v935 = vadd.f32 %v822, %v934
  %936 = vmatprep.mubr.bf16.mxu0 %v146
  %937 = vmatmul.mubr.bf16.gmra.mrb[0].mxu0 %v145
  %v938 = vpop.f32.mrb[0].mxu0
  %v939 = vadd.f32 %v826, %v938
  %v940 = vpop.f32.mrb[0].mxu0
  %v941 = vadd.f32 %v828, %v940
  %v942 = vpop.f32.mrb[0].mxu0
  %v943 = vadd.f32 %v830, %v942
  %v944 = vpop.f32.mrb[0].mxu0
  %v945 = vadd.f32 %v832, %v944
  %946 = vmatprep.mubr.bf16.mxu0 %v152
  %947 = vmatmul.mubr.bf16.gmra.mrb[0].mxu0 %v151
  %v948 = vpop.f32.mrb[0].mxu0
  %v949 = vadd.f32 %v836, %v948
  %v950 = vpop.f32.mrb[0].mxu0
  %v951 = vadd.f32 %v838, %v950
  %v952 = vpop.f32.mrb[0].mxu0
  %v953 = vadd.f32 %v840, %v952
  %v954 = vpop.f32.mrb[0].mxu0
  %v955 = vadd.f32 %v842, %v954
  %956 = vmatprep.mubr.bf16.mxu0 %v158
  %957 = vmatmul.mubr.bf16.gmra.mrb[0].mxu0 %v157
  %v958 = vpop.f32.mrb[0].mxu0
  %v959 = vadd.f32 %v846, %v958
  %v960 = vpop.f32.mrb[0].mxu0
  %v961 = vadd.f32 %v848, %v960
  %v962 = vpop.f32.mrb[0].mxu0
  %v963 = vadd.f32 %v850, %v962
  %v964 = vpop.f32.mrb[0].mxu0
  %v965 = vadd.f32 %v852, %v964
  %966 = vmatprep.mubr.bf16.mxu0 %v164
  %967 = vmatmul.mubr.bf16.gmra.mrb[0].mxu0 %v163
  %v968 = vpop.f32.mrb[0].mxu0
  %v969 = vadd.f32 %v856, %v968
  %v970 = vpop.f32.mrb[0].mxu0
  %v971 = vadd.f32 %v858, %v970
  %v972 = vpop.f32.mrb[0].mxu0
  %v973 = vadd.f32 %v860, %v972
  %v974 = vpop.f32.mrb[0].mxu0
  %v975 = vadd.f32 %v862, %v974
  %976 = vmatprep.mubr.bf16.mxu0 %v170
  %977 = vmatmul.mubr.bf16.gmra.mrb[0].mxu0 %v169
  %v978 = vpop.f32.mrb[0].mxu0
  %v979 = vadd.f32 %v866, %v978
  %v980 = vpop.f32.mrb[0].mxu0
  %v981 = vadd.f32 %v868, %v980
  %v982 = vpop.f32.mrb[0].mxu0
  %v983 = vadd.f32 %v870, %v982
  %v984 = vpop.f32.mrb[0].mxu0
  %v985 = vadd.f32 %v872, %v984
  %986 = vdwg.mxu0
  %987 = vmatprep.subr.bf16.mxu0 %v634
  %988 = vmatpush1.bf16.msra.mxu0 %v633
  %989 = vmatprep.subr.bf16.mxu0 %v636
  %990 = vmatpush1.bf16.msra.mxu0 %v635
  %991 = vmatprep.subr.bf16.mxu0 %v638
  %992 = vmatpush1.bf16.msra.mxu0 %v637
  %993 = vmatprep.subr.bf16.mxu0 %v640
  %994 = vmatpush1.bf16.msra.mxu0 %v639
  %995 = vmatprep.subr.bf16.mxu0 %v642
  %996 = vmatpush1.bf16.msra.mxu0 %v641
  %997 = vmatprep.subr.bf16.mxu0 %v644
  %998 = vmatpush1.bf16.msra.mxu0 %v643
  %999 = vmatprep.subr.bf16.mxu0 %v646
  %1000 = vmatpush1.bf16.msra.mxu0 %v645
  %1001 = vmatprep.subr.bf16.mxu0 %v648
  %1002 = vmatpush1.bf16.msra.mxu0 %v647
  %1003 = vmatprep.subr.bf16.mxu0 %v650
  %1004 = vmatpush1.bf16.msra.mxu0 %v649
  %1005 = vmatprep.subr.bf16.mxu0 %v652
  %1006 = vmatpush1.bf16.msra.mxu0 %v651
  %1007 = vmatprep.subr.bf16.mxu0 %v654
  %1008 = vmatpush1.bf16.msra.mxu0 %v653
  %1009 = vmatprep.subr.bf16.mxu0 %v656
  %1010 = vmatpush1.bf16.msra.mxu0 %v655
  %1011 = vmatprep.subr.bf16.mxu0 %v658
  %1012 = vmatpush1.bf16.msra.mxu0 %v657
  %1013 = vmatprep.subr.bf16.mxu0 %v660
  %1014 = vmatpush1.bf16.msra.mxu0 %v659
  %1015 = vmatprep.subr.bf16.mxu0 %v662
  %1016 = vmatpush1.bf16.msra.mxu0 %v661
  %1017 = vmatprep.subr.bf16.mxu0 %v664
  %1018 = vmatpush1.bf16.msra.mxu0 %v663
  %1019 = vmatprep.mubr.bf16.mxu0 %v130
  %1020 = vmatmul.mubr.bf16.gmra.mrb[0].mxu0 %v129
  %v1021 = vpop.f32.mrb[0].mxu0
  %v1022 = vadd.f32 %v909, %v1021
  %v1023 = vpop.f32.mrb[0].mxu0
  %v1024 = vadd.f32 %v911, %v1023
  %v1025 = vpop.f32.mrb[0].mxu0
  %v1026 = vadd.f32 %v913, %v1025
  %v1027 = vpop.f32.mrb[0].mxu0
  %v1028 = vadd.f32 %v915, %v1027
  %1029 = vmatprep.mubr.bf16.mxu0 %v136
  %1030 = vmatmul.mubr.bf16.gmra.mrb[0].mxu0 %v135
  %v1031 = vpop.f32.mrb[0].mxu0
  %v1032 = vadd.f32 %v919, %v1031
  %v1033 = vpop.f32.mrb[0].mxu0
  %v1034 = vadd.f32 %v921, %v1033
  %v1035 = vpop.f32.mrb[0].mxu0
  %v1036 = vadd.f32 %v923, %v1035
  %v1037 = vpop.f32.mrb[0].mxu0
  %v1038 = vadd.f32 %v925, %v1037
  %1039 = vmatprep.mubr.bf16.mxu0 %v142
  %1040 = vmatmul.mubr.bf16.gmra.mrb[0].mxu0 %v141
  %v1041 = vpop.f32.mrb[0].mxu0
  %v1042 = vadd.f32 %v929, %v1041
  %v1043 = vpop.f32.mrb[0].mxu0
  %v1044 = vadd.f32 %v931, %v1043
  %v1045 = vpop.f32.mrb[0].mxu0
  %v1046 = vadd.f32 %v933, %v1045
  %v1047 = vpop.f32.mrb[0].mxu0
  %v1048 = vadd.f32 %v935, %v1047
  %1049 = vmatprep.mubr.bf16.mxu0 %v148
  %1050 = vmatmul.mubr.bf16.gmra.mrb[0].mxu0 %v147
  %v1051 = vpop.f32.mrb[0].mxu0
  %v1052 = vadd.f32 %v939, %v1051
  %v1053 = vpop.f32.mrb[0].mxu0
  %v1054 = vadd.f32 %v941, %v1053
  %v1055 = vpop.f32.mrb[0].mxu0
  %v1056 = vadd.f32 %v943, %v1055
  %v1057 = vpop.f32.mrb[0].mxu0
  %v1058 = vadd.f32 %v945, %v1057
  %1059 = vmatprep.mubr.bf16.mxu0 %v154
  %1060 = vmatmul.mubr.bf16.gmra.mrb[0].mxu0 %v153
  %v1061 = vpop.f32.mrb[0].mxu0
  %v1062 = vadd.f32 %v949, %v1061
  %v1063 = vpop.f32.mrb[0].mxu0
  %v1064 = vadd.f32 %v951, %v1063
  %v1065 = vpop.f32.mrb[0].mxu0
  %v1066 = vadd.f32 %v953, %v1065
  %v1067 = vpop.f32.mrb[0].mxu0
  %v1068 = vadd.f32 %v955, %v1067
  %1069 = vmatprep.mubr.bf16.mxu0 %v160
  %1070 = vmatmul.mubr.bf16.gmra.mrb[0].mxu0 %v159
  %v1071 = vpop.f32.mrb[0].mxu0
  %v1072 = vadd.f32 %v959, %v1071
  %v1073 = vpop.f32.mrb[0].mxu0
  %v1074 = vadd.f32 %v961, %v1073
  %v1075 = vpop.f32.mrb[0].mxu0
  %v1076 = vadd.f32 %v963, %v1075
  %v1077 = vpop.f32.mrb[0].mxu0
  %v1078 = vadd.f32 %v965, %v1077
  %1079 = vmatprep.mubr.bf16.mxu0 %v166
  %1080 = vmatmul.mubr.bf16.gmra.mrb[0].mxu0 %v165
  %v1081 = vpop.f32.mrb[0].mxu0
  %v1082 = vadd.f32 %v969, %v1081
  %v1083 = vpop.f32.mrb[0].mxu0
  %v1084 = vadd.f32 %v971, %v1083
  %v1085 = vpop.f32.mrb[0].mxu0
  %v1086 = vadd.f32 %v973, %v1085
  %v1087 = vpop.f32.mrb[0].mxu0
  %v1088 = vadd.f32 %v975, %v1087
  %1089 = vmatprep.mubr.bf16.mxu0 %v172
  %1090 = vmatmul.mubr.bf16.gmra.mrb[0].mxu0 %v171
  %v1091 = vpop.f32.mrb[0].mxu0
  %v1092 = vadd.f32 %v979, %v1091
  %v1093 = vpop.f32.mrb[0].mxu0
  %v1094 = vadd.f32 %v981, %v1093
  %v1095 = vpop.f32.mrb[0].mxu0
  %v1096 = vadd.f32 %v983, %v1095
  %v1097 = vpop.f32.mrb[0].mxu0
  %v1098 = vadd.f32 %v985, %v1097
  %1099 = vdwg.mxu0
  %v1100 = vmax.f32 %v1022, 0.0
  %v1101 = vmax.f32 %v1024, 0.0
  %v1102 = vmax.f32 %v1026, 0.0
  %v1103 = vmax.f32 %v1028, 0.0
  %v1104 = vmax.f32 %v1032, 0.0
  %v1105 = vmax.f32 %v1034, 0.0
  %v1106 = vmax.f32 %v1036, 0.0
  %v1107 = vmax.f32 %v1038, 0.0
  %v1108 = vmax.f32 %v1042, 0.0
  %v1109 = vmax.f32 %v1044, 0.0
  %v1110 = vmax.f32 %v1046, 0.0
  %v1111 = vmax.f32 %v1048, 0.0
  %v1112 = vmax.f32 %v1052, 0.0
  %v1113 = vmax.f32 %v1054, 0.0
  %v1114 = vmax.f32 %v1056, 0.0
  %v1115 = vmax.f32 %v1058, 0.0
  %v1116 = vmax.f32 %v1062, 0.0
  %v1117 = vmax.f32 %v1064, 0.0
  %v1118 = vmax.f32 %v1066, 0.0
  %v1119 = vmax.f32 %v1068, 0.0
  %v1120 = vmax.f32 %v1072, 0.0
  %v1121 = vmax.f32 %v1074, 0.0
  %v1122 = vmax.f32 %v1076, 0.0
  %v1123 = vmax.f32 %v1078, 0.0
  %v1124 = vmax.f32 %v1082, 0.0
  %v1125 = vmax.f32 %v1084, 0.0
  %v1126 = vmax.f32 %v1086, 0.0
  %v1127 = vmax.f32 %v1088, 0.0
  %v1128 = vmax.f32 %v1092, 0.0
  %v1129 = vmax.f32 %v1094, 0.0
  %v1130 = vmax.f32 %v1096, 0.0
  %v1131 = vmax.f32 %v1098, 0.0
  %v1132 = vpack.c.bf16 %v1102, %v1100
  %v1133 = vpack.c.bf16 %v1103, %v1101
  %v1134 = vpack.c.bf16 %v1106, %v1104
  %v1135 = vpack.c.bf16 %v1107, %v1105
  %v1136 = vpack.c.bf16 %v1110, %v1108
  %v1137 = vpack.c.bf16 %v1111, %v1109
  %v1138 = vpack.c.bf16 %v1114, %v1112
  %v1139 = vpack.c.bf16 %v1115, %v1113
  %v1140 = vpack.c.bf16 %v1118, %v1116
  %v1141 = vpack.c.bf16 %v1119, %v1117
  %v1142 = vpack.c.bf16 %v1122, %v1120
  %v1143 = vpack.c.bf16 %v1123, %v1121
  %v1144 = vpack.c.bf16 %v1126, %v1124
  %v1145 = vpack.c.bf16 %v1127, %v1125
  %v1146 = vpack.c.bf16 %v1130, %v1128
  %v1147 = vpack.c.bf16 %v1131, %v1129
  %v1148 = vld [vmem:[%s3] sm:$0xf]
  %v1149 = vld [vmem:[%s3 + $0x4] sm:$0xf]
  %v1150 = vld [vmem:[%s3 + $0x8] sm:$0xf]
  %v1151 = vld [vmem:[%s3 + $0xc] sm:$0xf]
  %v1152 = vld [vmem:[%s3 + $0x10] sm:$0xf]
  %v1153 = vld [vmem:[%s3 + $0x14] sm:$0xf]
  %v1154 = vld [vmem:[%s3 + $0x18] sm:$0xf]
  %v1155 = vld [vmem:[%s3 + $0x1c] sm:$0xf]
  %v1156 = vld [vmem:[%s3 + $0x20] sm:$0xf]
  %v1157 = vld [vmem:[%s3 + $0x24] sm:$0xf]
  %v1158 = vld [vmem:[%s3 + $0x28] sm:$0xf]
  %v1159 = vld [vmem:[%s3 + $0x2c] sm:$0xf]
  %v1160 = vld [vmem:[%s3 + $0x30] sm:$0xf]
  %v1161 = vld [vmem:[%s3 + $0x34] sm:$0xf]
  %v1162 = vld [vmem:[%s3 + $0x38] sm:$0xf]
  %v1163 = vld [vmem:[%s3 + $0x3c] sm:$0xf]
  %v1164 = vld [vmem:[%s3 + $0x40] sm:$0xf]
  %v1165 = vld [vmem:[%s3 + $0x44] sm:$0xf]
  %v1166 = vld [vmem:[%s3 + $0x48] sm:$0xf]
  %v1167 = vld [vmem:[%s3 + $0x4c] sm:$0xf]
  %v1168 = vld [vmem:[%s3 + $0x50] sm:$0xf]
  %v1169 = vld [vmem:[%s3 + $0x54] sm:$0xf]
  %v1170 = vld [vmem:[%s3 + $0x58] sm:$0xf]
  %v1171 = vld [vmem:[%s3 + $0x5c] sm:$0xf]
  %v1172 = vld [vmem:[%s3 + $0x60] sm:$0xf]
  %v1173 = vld [vmem:[%s3 + $0x64] sm:$0xf]
  %v1174 = vld [vmem:[%s3 + $0x68] sm:$0xf]
  %v1175 = vld [vmem:[%s3 + $0x6c] sm:$0xf]
  %v1176 = vld [vmem:[%s3 + $0x70] sm:$0xf]
  %v1177 = vld [vmem:[%s3 + $0x74] sm:$0xf]
  %v1178 = vld [vmem:[%s3 + $0x78] sm:$0xf]
  %v1179 = vld [vmem:[%s3 + $0x7c] sm:$0xf]
  %v1180 = vld [vmem:[%s4] sm:$0x1]
  %v1182 = vlaneseq
  %v1183 = vshrl.u32 %v1182, 7
  %v1184 = vsub.s32 0, %v1183
  %v1185 = vrot.slane %v1180, %v1184
  %v1219 = vunpack.c.l.b16 %v1148
  %v1220 = vunpack.c.l.b16 %v1149
  %v1221 = vunpack.c.l.b16 %v1150
  %v1222 = vunpack.c.l.b16 %v1151
  %v1223 = vunpack.c.l.b16 %v1152
  %v1224 = vunpack.c.l.b16 %v1153
  %v1225 = vunpack.c.l.b16 %v1154
  %v1226 = vunpack.c.l.b16 %v1155
  %v1227 = vunpack.c.l.b16 %v1156
  %v1228 = vunpack.c.l.b16 %v1157
  %v1229 = vunpack.c.l.b16 %v1158
  %v1230 = vunpack.c.l.b16 %v1159
  %v1231 = vunpack.c.l.b16 %v1160
  %v1232 = vunpack.c.l.b16 %v1161
  %v1233 = vunpack.c.l.b16 %v1162
  %v1234 = vunpack.c.l.b16 %v1163
  %v1235 = vunpack.c.l.b16 %v1164
  %v1236 = vunpack.c.l.b16 %v1165
  %v1237 = vunpack.c.l.b16 %v1166
  %v1238 = vunpack.c.l.b16 %v1167
  %v1239 = vunpack.c.l.b16 %v1168
  %v1240 = vunpack.c.l.b16 %v1169
  %v1241 = vunpack.c.l.b16 %v1170
  %v1242 = vunpack.c.l.b16 %v1171
  %v1243 = vunpack.c.l.b16 %v1172
  %v1244 = vunpack.c.l.b16 %v1173
  %v1245 = vunpack.c.l.b16 %v1174
  %v1246 = vunpack.c.l.b16 %v1175
  %v1247 = vunpack.c.l.b16 %v1176
  %v1248 = vunpack.c.l.b16 %v1177
  %v1249 = vunpack.c.l.b16 %v1178
  %v1250 = vunpack.c.l.b16 %v1179
  %v1251 = vpack.c.b16 %v1220, %v1219
  %v1252 = vpack.c.b16 %v1222, %v1221
  %v1253 = vpack.c.b16 %v1224, %v1223
  %v1254 = vpack.c.b16 %v1226, %v1225
  %v1255 = vpack.c.b16 %v1228, %v1227
  %v1256 = vpack.c.b16 %v1230, %v1229
  %v1257 = vpack.c.b16 %v1232, %v1231
  %v1258 = vpack.c.b16 %v1234, %v1233
  %v1259 = vpack.c.b16 %v1236, %v1235
  %v1260 = vpack.c.b16 %v1238, %v1237
  %v1261 = vpack.c.b16 %v1240, %v1239
  %v1262 = vpack.c.b16 %v1242, %v1241
  %v1263 = vpack.c.b16 %v1244, %v1243
  %v1264 = vpack.c.b16 %v1246, %v1245
  %v1265 = vpack.c.b16 %v1248, %v1247
  %v1266 = vpack.c.b16 %v1250, %v1249
  %1283 = vmatprep.subr.bf16.mxu0 0
  %1284 = vmatpush1.bf16.msra.mxu0 %v1251
  %1285 = vmatprep.subr.bf16.mxu0 0
  %1286 = vmatpush1.bf16.msra.mxu0 %v1252
  %1287 = vmatprep.subr.bf16.mxu0 0
  %1288 = vmatpush1.bf16.msra.mxu0 %v1253
  %1289 = vmatprep.subr.bf16.mxu0 0
  %1290 = vmatpush1.bf16.msra.mxu0 %v1254
  %1291 = vmatprep.subr.bf16.mxu0 0
  %1292 = vmatpush1.bf16.msra.mxu0 %v1255
  %1293 = vmatprep.subr.bf16.mxu0 0
  %1294 = vmatpush1.bf16.msra.mxu0 %v1256
  %1295 = vmatprep.subr.bf16.mxu0 0
  %1296 = vmatpush1.bf16.msra.mxu0 %v1257
  %1297 = vmatprep.subr.bf16.mxu0 0
  %1298 = vmatpush1.bf16.msra.mxu0 %v1258
  %1299 = vmatprep.subr.bf16.mxu0 0
  %1300 = vmatpush1.bf16.msra.mxu0 %v1259
  %1301 = vmatprep.subr.bf16.mxu0 0
  %1302 = vmatpush1.bf16.msra.mxu0 %v1260
  %1303 = vmatprep.subr.bf16.mxu0 0
  %1304 = vmatpush1.bf16.msra.mxu0 %v1261
  %1305 = vmatprep.subr.bf16.mxu0 0
  %1306 = vmatpush1.bf16.msra.mxu0 %v1262
  %1307 = vmatprep.subr.bf16.mxu0 0
  %1308 = vmatpush1.bf16.msra.mxu0 %v1263
  %1309 = vmatprep.subr.bf16.mxu0 0
  %1310 = vmatpush1.bf16.msra.mxu0 %v1264
  %1311 = vmatprep.subr.bf16.mxu0 0
  %1312 = vmatpush1.bf16.msra.mxu0 %v1265
  %1313 = vmatprep.subr.bf16.mxu0 0
  %1314 = vmatpush1.bf16.msra.mxu0 %v1266
  %1315 = vmatprep.mubr.bf16.mxu0 %v1133
  %1316 = vmatmul.mubr.bf16.gmra.mrb[0].mxu0 %v1132
  %v1317 = vpop.f32.mrb[0].mxu0
  %v1318 = vadd.f32 %v1185, %v1317
  %v1319 = vpop.f32.mrb[0].mxu0
  %v1320 = vpop.f32.mrb[0].mxu0
  %v1321 = vadd.f32 %v1185, %v1320
  %v1322 = vpop.f32.mrb[0].mxu0
  %1323 = vmatprep.mubr.bf16.mxu0 %v1135
  %1324 = vmatmul.mubr.bf16.gmra.mrb[0].mxu0 %v1134
  %v1325 = vpop.f32.mrb[0].mxu0
  %v1326 = vadd.f32 %v1185, %v1325
  %v1327 = vpop.f32.mrb[0].mxu0
  %v1328 = vpop.f32.mrb[0].mxu0
  %v1329 = vadd.f32 %v1185, %v1328
  %v1330 = vpop.f32.mrb[0].mxu0
  %1331 = vmatprep.mubr.bf16.mxu0 %v1137
  %1332 = vmatmul.mubr.bf16.gmra.mrb[0].mxu0 %v1136
  %v1333 = vpop.f32.mrb[0].mxu0
  %v1334 = vadd.f32 %v1185, %v1333
  %v1335 = vpop.f32.mrb[0].mxu0
  %v1336 = vpop.f32.mrb[0].mxu0
  %v1337 = vadd.f32 %v1185, %v1336
  %v1338 = vpop.f32.mrb[0].mxu0
  %1339 = vmatprep.mubr.bf16.mxu0 %v1139
  %1340 = vmatmul.mubr.bf16.gmra.mrb[0].mxu0 %v1138
  %v1341 = vpop.f32.mrb[0].mxu0
  %v1342 = vadd.f32 %v1185, %v1341
  %v1343 = vpop.f32.mrb[0].mxu0
  %v1344 = vpop.f32.mrb[0].mxu0
  %v1345 = vadd.f32 %v1185, %v1344
  %v1346 = vpop.f32.mrb[0].mxu0
  %1347 = vmatprep.mubr.bf16.mxu0 %v1141
  %1348 = vmatmul.mubr.bf16.gmra.mrb[0].mxu0 %v1140
  %v1349 = vpop.f32.mrb[0].mxu0
  %v1350 = vadd.f32 %v1185, %v1349
  %v1351 = vpop.f32.mrb[0].mxu0
  %v1352 = vpop.f32.mrb[0].mxu0
  %v1353 = vadd.f32 %v1185, %v1352
  %v1354 = vpop.f32.mrb[0].mxu0
  %1355 = vmatprep.mubr.bf16.mxu0 %v1143
  %1356 = vmatmul.mubr.bf16.gmra.mrb[0].mxu0 %v1142
  %v1357 = vpop.f32.mrb[0].mxu0
  %v1358 = vadd.f32 %v1185, %v1357
  %v1359 = vpop.f32.mrb[0].mxu0
  %v1360 = vpop.f32.mrb[0].mxu0
  %v1361 = vadd.f32 %v1185, %v1360
  %v1362 = vpop.f32.mrb[0].mxu0
  %1363 = vmatprep.mubr.bf16.mxu0 %v1145
  %1364 = vmatmul.mubr.bf16.gmra.mrb[0].mxu0 %v1144
  %v1365 = vpop.f32.mrb[0].mxu0
  %v1366 = vadd.f32 %v1185, %v1365
  %v1367 = vpop.f32.mrb[0].mxu0
  %v1368 = vpop.f32.mrb[0].mxu0
  %v1369 = vadd.f32 %v1185, %v1368
  %v1370 = vpop.f32.mrb[0].mxu0
  %1371 = vmatprep.mubr.bf16.mxu0 %v1147
  %1372 = vmatmul.mubr.bf16.gmra.mrb[0].mxu0 %v1146
  %v1373 = vpop.f32.mrb[0].mxu0
  %v1374 = vadd.f32 %v1185, %v1373
  %v1375 = vpop.f32.mrb[0].mxu0
  %v1376 = vpop.f32.mrb[0].mxu0
  %v1377 = vadd.f32 %v1185, %v1376
  %v1378 = vpop.f32.mrb[0].mxu0
  %1379 = vdwg.mxu0
  %v1380 = vmax.f32 %v1318, 0.0
  %v1381 = vmax.f32 %v1321, 0.0
  %v1382 = vmax.f32 %v1326, 0.0
  %v1383 = vmax.f32 %v1329, 0.0
  %v1384 = vmax.f32 %v1334, 0.0
  %v1385 = vmax.f32 %v1337, 0.0
  %v1386 = vmax.f32 %v1342, 0.0
  %v1387 = vmax.f32 %v1345, 0.0
  %v1388 = vmax.f32 %v1350, 0.0
  %v1389 = vmax.f32 %v1353, 0.0
  %v1390 = vmax.f32 %v1358, 0.0
  %v1391 = vmax.f32 %v1361, 0.0
  %v1392 = vmax.f32 %v1366, 0.0
  %v1393 = vmax.f32 %v1369, 0.0
  %v1394 = vmax.f32 %v1374, 0.0
  %v1395 = vmax.f32 %v1377, 0.0
  %v1396 = vld [vmem:[%s5] sm:$0x1]
  %v1397 = vld [vmem:[#allocation2] sm:$0x1]
  %1399 = vset.pattern.permute.xlu0 0
  %1400 = vperm.xlu0 %1399, %v1397
  %v1401 = vpop.permute.xlu0 %1400
  %v1403 = vlaneseq
  %v1404 = vshrl.u32 %v1403, 7
  %v1405 = vsub.s32 0, %v1404
  %v1406 = vrot.slane %v1401, %v1405
  %1407 = vmatprep.subr.mxu0 0.0
  %1408 = vmatpush1.xpose.msra.mxu0 %v1380
  %1409 = vmatprep.subr.mxu0 0.0
  %1410 = vmatpush1.xpose.msra.mxu0 %v1381
  %1411 = vmatprep.subr.mxu0 0.0
  %1412 = vmatpush1.xpose.msra.mxu0 %v1382
  %1413 = vmatprep.subr.mxu0 0.0
  %1414 = vmatpush1.xpose.msra.mxu0 %v1383
  %1415 = vmatprep.subr.mxu0 0.0
  %1416 = vmatpush1.xpose.msra.mxu0 %v1384
  %1417 = vmatprep.subr.mxu0 0.0
  %1418 = vmatpush1.xpose.msra.mxu0 %v1385
  %1419 = vmatprep.subr.mxu0 0.0
  %1420 = vmatpush1.xpose.msra.mxu0 %v1386
  %1421 = vmatprep.subr.mxu0 0.0
  %1422 = vmatpush1.xpose.msra.mxu0 %v1387
  %1423 = vmatprep.subr.mxu0 0.0
  %1424 = vmatpush1.xpose.msra.mxu0 %v1388
  %1425 = vmatprep.subr.mxu0 0.0
  %1426 = vmatpush1.xpose.msra.mxu0 %v1389
  %1427 = vmatprep.subr.mxu0 0.0
  %1428 = vmatpush1.xpose.msra.mxu0 %v1390
  %1429 = vmatprep.subr.mxu0 0.0
  %1430 = vmatpush1.xpose.msra.mxu0 %v1391
  %1431 = vmatprep.subr.mxu0 0.0
  %1432 = vmatpush1.xpose.msra.mxu0 %v1392
  %1433 = vmatprep.subr.mxu0 0.0
  %1434 = vmatpush1.xpose.msra.mxu0 %v1393
  %1435 = vmatprep.subr.mxu0 0.0
  %1436 = vmatpush1.xpose.msra.mxu0 %v1394
  %1437 = vmatprep.subr.mxu0 0.0
  %1438 = vmatpush1.xpose.msra.mxu0 %v1395
  %1439 = vmatprep.subr.mxu0 0.0
  %1440 = vmatpush1.xpose.msra.mxu0 0.0
  %1441 = vmatprep.subr.mxu0 0.0
  %1442 = vmatpush1.xpose.msra.mxu0 0.0
  %1443 = vmatprep.subr.mxu0 0.0
  %1444 = vmatpush1.xpose.msra.mxu0 0.0
  %1445 = vmatprep.subr.mxu0 0.0
  %1446 = vmatpush1.xpose.msra.mxu0 0.0
  %1447 = vmatprep.subr.mxu0 0.0
  %1448 = vmatpush1.xpose.msra.mxu0 0.0
  %1449 = vmatprep.subr.mxu0 0.0
  %1450 = vmatpush1.xpose.msra.mxu0 0.0
  %1451 = vmatprep.subr.mxu0 0.0
  %1452 = vmatpush1.xpose.msra.mxu0 0.0
  %1453 = vmatprep.subr.mxu0 0.0
  %1454 = vmatpush1.xpose.msra.mxu0 0.0
  %1455 = vmatprep.subr.mxu0 0.0
  %1456 = vmatpush1.xpose.msra.mxu0 0.0
  %1457 = vmatprep.subr.mxu0 0.0
  %1458 = vmatpush1.xpose.msra.mxu0 0.0
  %1459 = vmatprep.subr.mxu0 0.0
  %1460 = vmatpush1.xpose.msra.mxu0 0.0
  %1461 = vmatprep.subr.mxu0 0.0
  %1462 = vmatpush1.xpose.msra.mxu0 0.0
  %1463 = vmatprep.subr.mxu0 0.0
  %1464 = vmatpush1.xpose.msra.mxu0 0.0
  %1465 = vmatprep.subr.mxu0 0.0
  %1466 = vmatpush1.xpose.msra.mxu0 0.0
  %1467 = vmatprep.subr.mxu0 0.0
  %1468 = vmatpush1.xpose.msra.mxu0 0.0
  %1469 = vmatprep.subr.mxu0 0.0
  %1470 = vmatpush1.xpose.msra.mxu0 0.0
  %1471 = vmatprep.mubr.f32.mxu0 0.0
  %1472 = vmatmul.mubr.f32.gmra.mrb[0].mxu0 %v1396
  %v1473 = vpop.f32.mrb[0].mxu0
  %v1474 = vadd.f32 %v1406, %v1473
  %v1475 = vpop.f32.mrb[0].mxu0
  %1476 = vdwg.mxu0
  %v1477 = vtanh.pop %v1474
  %1478 = vst [vmem:[%s7] sm:$0x1] %v1477
  // Predicated region
  $region30: #{chess_value_network.2} parent=0 // pred_check
    _
  $region31: #{chess_value_network.2} parent=0 // pred_check_branch
    %1480 = sbr.rel (0) target = $region33
  $region32: #{chess_value_network.2} parent=0 // pred_region
    _
  $region33: #{chess_value_network.2} parent=0 // pred_fallthru
    _
  // Predicated region
  $region34: #{chess_value_network.2} parent=0 // pred_check
    _
  $region35: #{chess_value_network.2} parent=0 // pred_check_branch
    %1482 = sbr.rel (0) target = $region37
  $region36: #{chess_value_network.2} parent=0 // pred_region
    _
  $region37: #{chess_value_network.2} parent=0 // pred_fallthru
    _

</llo_original>
